<compile_context>
chip_gen: v7x
topology: tpu7x:2x2x1
jax: 0.10.0
libtpu: 0.0.40
codegen_flags: <defaults>
</compile_context>

<pallas_src>
import jax
import jax.numpy as jnp
import numpy as np
from jax.experimental import pallas as pl
from jax.experimental.pallas import tpu as pltpu

NUM_CLASS = 13          # S3DIS
BF16 = jnp.bfloat16

_SHARED_MACS = 9 * 64 + 64 * 64 + 64 * 64 + 64 * 128 + 128 * 1024   # per point


def _dot(a, b):
    # bf16 x bf16 -> f32 accumulate on the MXU
    return jnp.dot(a, b, preferred_element_type=jnp.float32)


def _relu_bf16(x):
    # fused bias-added-ReLU + downcast in one expression: activation materialized once, in bf16
    return jnp.maximum(x, 0.0).astype(BF16)


# --------------------------------- kernels -----------------------------------

def feature_kernel(x_ref,
                   w1, b1, w2, b2, w3, b3, w4, b4, w5, b5,
                   f_ref, pmax_ref):
    """Shared per-point MLP 9->64->64->64->128->1024 (Conv1d(k=1)+BN+ReLU folded).
    Streams f (bf16) to HBM and accumulates a per-(batch, core-chunk) running max of
    the f32 feature into a resident output block."""
    t = pl.program_id(2)

    x = x_ref[0]                                              # (TP, 9) bf16
    h = _relu_bf16(_dot(x, w1[...]) + b1[...])                # (TP, 64)
    h = _relu_bf16(_dot(h, w2[...]) + b2[...])                # (TP, 64)
    h = _relu_bf16(_dot(h, w3[...]) + b3[...])                # (TP, 64)
    h = _relu_bf16(_dot(h, w4[...]) + b4[...])                # (TP, 128)
    f = jnp.maximum(_dot(h, w5[...]) + b5[...], 0.0)          # (TP, 1024) f32 (exact max)

    f_ref[0] = f.astype(BF16)                                 # cached point feature for kernel 2
    part = jnp.max(f, axis=0, keepdims=True)                  # (1, 1024)

    @pl.when(t == 0)
    def _init():
        pmax_ref[0, 0] = part

    @pl.when(t > 0)
    def _update():
        pmax_ref[0, 0] = jnp.maximum(pmax_ref[0, 0], part)


def classifier_kernel(f_ref, gb_ref,
                      w8a, w9, b9, w10, b10,
                      out_ref):
    """Classifier 1152->512->256->num_class on the cached point feature.  The global
    feature contribution (g @ W8b + b8) is precomputed per batch element and enters as
    a bias-like add (concat-as-sum)."""
    f = f_ref[0]                                              # (TP, 1024) bf16
    gb = gb_ref[0]                                            # (1, 512) f32
    h = _relu_bf16(_dot(f, w8a[...]) + gb)                    # (TP, 512)
    # TODO(synk): Dropout(0.5) in the classifier blocks is identity in eval mode; train-mode dropout not implemented.
    h = _relu_bf16(_dot(h, w9[...]) + b9[...])                # (TP, 256)
    out_ref[0] = (_dot(h, w10[...]) + b10[...]).astype(out_ref.dtype)   # (TP, 128) bf16, lane-dense


# --------------------------------- wrapper -----------------------------------

def _cdiv(a, b):
    return -(-a // b)


def _round_up(x, m):
    return ((x + m - 1) // m) * m


def _tpu_vmem_bytes():
    try:
        return int(pltpu.get_tpu_info().vmem_capacity_bytes)
    except Exception:
        return 64 << 20                      # conservative (v7x-sized) fallback


def _const_spec(shape):
    """Grid-invariant parameter: full block, constant index, single VMEM buffer.
    NOTE: the TypeError fallback (older jax) silently drops pipeline_mode and
    double-buffers the constants; functionally identical."""
    idx = lambda *_: (0,) * len(shape)
    try:
        return pl.BlockSpec(shape, idx, pipeline_mode=pl.Buffered(1))
    except TypeError:
        return pl.BlockSpec(shape, idx)


def _param_bytes(params):
    return sum(int(p.size) * p.dtype.itemsize for p in params)


def pointnet_forward(points, extras, params, num_class=NUM_CLASS):
    """points: (B, 6, P), extras: (B, 3, P) in torch NCL layout.  Returns (B, num_class, P)."""
    (w1, b1, w2, b2, w3, b3, w4, b4, w5, b5,
     w6, b6, w7, b7, w8a, w8b, b8, w9, b9, w10, b10) = params

    x = jnp.concatenate([points, extras], axis=1)             # (B, 9, P)
    x = jnp.transpose(x, (0, 2, 1)).astype(jnp.float32)       # (B, P, 9)
    B, P, Cin = x.shape

    vmem_cap = _tpu_vmem_bytes()
    vmem_limit = max(32 << 20, min(vmem_cap - (16 << 20), 100 << 20))

    # Padding-aware tiling: pick the tile count first, then the tile size (multiple of
    # 16), instead of rounding P up to a fixed big tile.  TP target 2048 fits every
    # generation's VMEM with this kernel split (~20 MiB working sets).
    TILE_TARGET = 2048
    T = max(1, _cdiv(P, TILE_TARGET))
    C = 2 if T >= 2 else 1                    # core-split axis for kernel 1 (B may be 1)
    T = _round_up(T, C)
    Tc = T // C
    TP = _round_up(_cdiv(P, T), 16)
    P_pad = T * TP
    if P_pad != P:
        # replicate the last real point: keeps the global max exact; padded rows are dropped
        x = jnp.pad(x, ((0, 0), (0, P_pad - P), (0, 0)), mode="edge")
    x = x.astype(BF16)

    # bf16 weights (f32 biases); pad the final layer to a lane-dense 128-class output
    ncp = _round_up(num_class, 128)
    to_bf16 = lambda w: w.astype(BF16)
    w1b, w2b, w3b, w4b, w5b = map(to_bf16, (w1, w2, w3, w4, w5))
    w8ab, w9b = to_bf16(w8a), to_bf16(w9)
    w10p = jnp.pad(w10, ((0, 0), (0, ncp - num_class))).astype(BF16)
    b10p = jnp.pad(b10, ((0, 0), (0, ncp - num_class)))

    F = w5.shape[1]                           # point-feature width (1024)
    G8 = w8b.shape[1]                         # classifier hidden width (512)
    shared = (w1b, b1, w2b, b2, w3b, b3, w4b, b4, w5b, b5)

    pt_idx = lambda b, c, t: (b, c * Tc + t, 0)
    x_spec = pl.BlockSpec((1, TP, Cin), pt_idx)

    # ---- kernel 1: shared MLP, cache f (bf16) in HBM, partial per-chunk global max ----
    k1_flops = 2 * B * P_pad * _SHARED_MACS
    k1_bytes = (B * P_pad * Cin * 2 + _param_bytes(shared)
                + B * P_pad * F * 2 + B * C * F * 4)
    f_feat, pmax = pl.pallas_call(
        feature_kernel,
        out_shape=(jax.ShapeDtypeStruct((B, P_pad, F), BF16),
                   jax.ShapeDtypeStruct((B, C, 1, F), jnp.float32)),
        grid_spec=pltpu.PrefetchScalarGridSpec(
            num_scalar_prefetch=0,
            grid=(B, C, Tc),
            in_specs=[x_spec] + [_const_spec(p.shape) for p in shared],
            out_specs=(pl.BlockSpec((1, TP, F), pt_idx),
                       pl.BlockSpec((1, 1, 1, F), lambda b, c, t: (b, c, 0, 0))),
        ),
        compiler_params=pltpu.CompilerParams(
            dimension_semantics=("parallel", "parallel", "arbitrary"),
            vmem_limit_bytes=vmem_limit,
        ),
        cost_estimate=pl.CostEstimate(flops=int(k1_flops), transcendentals=0,
                                      bytes_accessed=int(k1_bytes)),
    )(x, *shared)

    # ---- tiny per-batch glue (M = B matmuls; MXU-degenerate, left to XLA) ----
    mm = lambda t_, w: jnp.dot(t_.astype(BF16), w.astype(BF16),
                               preferred_element_type=jnp.float32)
    gmax = jnp.max(pmax, axis=(1, 2))                          # (B, 1024) exact f32 max
    g = jnp.maximum(mm(gmax, w6) + b6, 0.0)                    # (B, 256)
    g = jnp.maximum(mm(g, w7) + b7, 0.0)                       # (B, 128)
    gbias = (mm(g, w8b) + b8).reshape(B, 1, G8)                # (B, 1, 512): g @ W8b + b8, precomputed once

    # ---- kernel 2: classifier on cached f with broadcast global-feature bias ----
    cls = (w8ab, w9b, b9, w10p, b10p)
    f_spec = pl.BlockSpec((1, TP, F), lambda b, t: (b, t, 0))
    gb_spec = pl.BlockSpec((1, 1, G8), lambda b, t: (b, 0, 0))
    k2_macs = 1024 * 512 + 512 * 256 + 256 * ncp
    k2_flops = 2 * B * P_pad * k2_macs
    k2_bytes = (B * P_pad * F * 2 + B * G8 * 4 + _param_bytes(cls)
                + B * P_pad * ncp * 2)
    out_pad = pl.pallas_call(
        classifier_kernel,
        out_shape=jax.ShapeDtypeStruct((B, P_pad, ncp), BF16),
        grid_spec=pltpu.PrefetchScalarGridSpec(
            num_scalar_prefetch=0,
            grid=(B, T),
            in_specs=[f_spec, gb_spec] + [_const_spec(p.shape) for p in cls],
            out_specs=pl.BlockSpec((1, TP, ncp), lambda b, t: (b, t, 0)),
        ),
        compiler_params=pltpu.CompilerParams(
            dimension_semantics=("parallel", "parallel"),
            vmem_limit_bytes=vmem_limit,
        ),
        cost_estimate=pl.CostEstimate(flops=int(k2_flops), transcendentals=0,
                                      bytes_accessed=int(k2_bytes)),
    )(f_feat, gbias, *cls)

    out = out_pad[:, :P, :num_class].astype(jnp.float32)       # drop point/class padding
    return jnp.transpose(out, (0, 2, 1))                       # (B, num_class, P)


# ---------------- deterministic parameter construction (glue) ----------------

def _make_conv_bn(key, cin, cout, eps=1e-5):
    """Conv1d(k=1, bias=True) + BatchNorm1d(eval) folded into (W_eff, b_eff).
    W stored transposed as (cin, cout) so the kernel computes x @ W."""
    k1, k2, k3, k4, k5, k6 = jax.random.split(key, 6)
    w = 0.1 * jax.random.normal(k1, (cin, cout), jnp.float32)
    b = 0.1 * jax.random.normal(k2, (cout,), jnp.float32)
    gamma = 1.0 + 0.1 * jax.random.normal(k3, (cout,), jnp.float32)
    beta = 0.1 * jax.random.normal(k4, (cout,), jnp.float32)
    mean = 0.1 * jax.random.normal(k5, (cout,), jnp.float32)
    var = jnp.abs(jax.random.normal(k6, (cout,), jnp.float32)) + 0.5
    scale = gamma / jnp.sqrt(var + eps)
    return w * scale[None, :], ((b - mean) * scale + beta).reshape(1, cout)


def _make_conv(key, cin, cout):
    k1, k2 = jax.random.split(key)
    w = 0.1 * jax.random.normal(k1, (cin, cout), jnp.float32)
    b = 0.1 * jax.random.normal(k2, (cout,), jnp.float32)
    return w, b.reshape(1, cout)


def build_params(key, num_class=NUM_CLASS):
    keys = jax.random.split(key, 11)
    # shared_mlp: 9 -> 64 -> 64 -> 64 -> 128 -> 1024
    w1, b1 = _make_conv_bn(keys[0], 9, 64)
    w2, b2 = _make_conv_bn(keys[1], 64, 64)
    w3, b3 = _make_conv_bn(keys[2], 64, 64)
    w4, b4 = _make_conv_bn(keys[3], 64, 128)
    w5, b5 = _make_conv_bn(keys[4], 128, 1024)
    # mlp: 1024 -> 256 -> 128
    w6, b6 = _make_conv_bn(keys[5], 1024, 256)
    w7, b7 = _make_conv_bn(keys[6], 256, 128)
    # classifier: 1152 -> 512 -> 256 -> num_class
    w8, b8 = _make_conv_bn(keys[7], 1152, 512)
    w8a, w8b = w8[:1024], w8[1024:]            # split for concat-as-sum trick
    w9, b9 = _make_conv_bn(keys[8], 512, 256)
    w10, b10 = _make_conv(keys[9], 256, num_class)
    return [w1, b1, w2, b2, w3, b3, w4, b4, w5, b5,
            w6, b6, w7, b7,
            w8a, w8b, b8, w9, b9, w10, b10]


def reference_forward(points, extras, p, num_class=NUM_CLASS):
    """Pure-JAX reference mirroring the kernel's bf16-input / f32-accumulate matmuls."""
    (w1, b1, w2, b2, w3, b3, w4, b4, w5, b5,
     w6, b6, w7, b7, w8a, w8b, b8, w9, b9, w10, b10) = p
    x = jnp.concatenate([points, extras], axis=1)
    x = jnp.transpose(x, (0, 2, 1)).astype(jnp.float32)      # (B, P, 9)
    mm = lambda t, w: jnp.dot(t.astype(BF16), w.astype(BF16),
                              preferred_element_type=jnp.float32)
    lin = lambda t, w, b: jnp.maximum(mm(t, w) + b, 0.0)
    f = lin(lin(lin(lin(lin(x, w1, b1), w2, b2), w3, b3), w4, b4), w5, b5)
    g = jnp.max(f, axis=1, keepdims=True)                    # (B, 1, 1024)
    g = lin(lin(g, w6, b6), w7, b7)                          # (B, 1, 128)
    h = jnp.maximum(mm(f, w8a) + mm(g, w8b) + b8, 0.0)
    h = lin(h, w9, b9)
    out = mm(h, w10) + b10                                   # (B, P, num_class)
    return jnp.transpose(out, (0, 2, 1))


if __name__ == "__main__":
    key = jax.random.PRNGKey(0)
    kp, kx, ke = jax.random.split(key, 3)

    B, P = 2, 64
    points = jax.random.normal(kx, (B, 6, P), jnp.float32)   # xyz + rgb
    extras = jax.random.normal(ke, (B, 3, P), jnp.float32)   # normalized loc
    params = build_params(kp, NUM_CLASS)

    out = jax.block_until_ready(pointnet_forward(points, extras, params, NUM_CLASS))
    assert out.shape == (B, NUM_CLASS, P), out.shape

    ref = jax.block_until_ready(reference_forward(points, extras, params, NUM_CLASS))
    np.testing.assert_allclose(np.asarray(out), np.asarray(ref), rtol=2e-2, atol=2e-2)

    print("KERNEL_OK")
</pallas_src>

<mosaic_0001>
module attributes {stable_mosaic.version = 11 : i64} {
  func.func @feature_kernel(%arg0: i32, %arg1: i32, %arg2: i32, %arg3: memref<1x64x9xbf16, #tpu.memory_space<vmem>>, %arg4: memref<9x64xbf16, #tpu.memory_space<vmem>>, %arg5: memref<1x64xf32, #tpu.memory_space<vmem>>, %arg6: memref<64x64xbf16, #tpu.memory_space<vmem>>, %arg7: memref<1x64xf32, #tpu.memory_space<vmem>>, %arg8: memref<64x64xbf16, #tpu.memory_space<vmem>>, %arg9: memref<1x64xf32, #tpu.memory_space<vmem>>, %arg10: memref<64x128xbf16, #tpu.memory_space<vmem>>, %arg11: memref<1x128xf32, #tpu.memory_space<vmem>>, %arg12: memref<128x1024xbf16, #tpu.memory_space<vmem>>, %arg13: memref<1x1024xf32, #tpu.memory_space<vmem>>, %arg14: memref<1x64x1024xbf16, #tpu.memory_space<vmem>>, %arg15: memref<1x1x1x1024xf32, #tpu.memory_space<vmem>>) attributes {dimension_semantics = [#tpu.dimension_semantics<parallel>, #tpu.dimension_semantics<parallel>, #tpu.dimension_semantics<arbitrary>], iteration_bounds = array<i64: 2, 1, 1>, scalar_prefetch = 0 : i64, scratch_operands = 0 : i64, tpu.core_type = #tpu.core_type<tc>, window_params = [{transform_indices = @transform_0, window_bounds = array<i64: 1, 64, 9>}, {pipeline_mode = #tpu.pipeline_mode<synchronous>, transform_indices = @transform_1, window_bounds = array<i64: 9, 64>}, {pipeline_mode = #tpu.pipeline_mode<synchronous>, transform_indices = @transform_2, window_bounds = array<i64: 1, 64>}, {pipeline_mode = #tpu.pipeline_mode<synchronous>, transform_indices = @transform_3, window_bounds = array<i64: 64, 64>}, {pipeline_mode = #tpu.pipeline_mode<synchronous>, transform_indices = @transform_4, window_bounds = array<i64: 1, 64>}, {pipeline_mode = #tpu.pipeline_mode<synchronous>, transform_indices = @transform_5, window_bounds = array<i64: 64, 64>}, {pipeline_mode = #tpu.pipeline_mode<synchronous>, transform_indices = @transform_6, window_bounds = array<i64: 1, 64>}, {pipeline_mode = #tpu.pipeline_mode<synchronous>, transform_indices = @transform_7, window_bounds = array<i64: 64, 128>}, {pipeline_mode = #tpu.pipeline_mode<synchronous>, transform_indices = @transform_8, window_bounds = array<i64: 1, 128>}, {pipeline_mode = #tpu.pipeline_mode<synchronous>, transform_indices = @transform_9, window_bounds = array<i64: 128, 1024>}, {pipeline_mode = #tpu.pipeline_mode<synchronous>, transform_indices = @transform_10, window_bounds = array<i64: 1, 1024>}, {transform_indices = @transform_11, window_bounds = array<i64: 1, 64, 1024>}, {transform_indices = @transform_12, window_bounds = array<i64: 1, 1, 1, 1024>}]} {
    %c0 = arith.constant 0 : index
    %c0_0 = arith.constant 0 : index
    %c0_1 = arith.constant 0 : index
    %0 = vector.load %arg3[%c0, %c0_0, %c0_1] : memref<1x64x9xbf16, #tpu.memory_space<vmem>>, vector<1x64x9xbf16>
    %1 = vector.shape_cast %0 : vector<1x64x9xbf16> to vector<64x9xbf16>
    %c0_2 = arith.constant 0 : index
    %c0_3 = arith.constant 0 : index
    %2 = vector.load %arg4[%c0_2, %c0_3] : memref<9x64xbf16, #tpu.memory_space<vmem>>, vector<9x64xbf16>
    %cst = arith.constant dense<0.000000e+00> : vector<64x64xf32>
    %3 = tpu.matmul %1, %2, %cst {dimension_numbers = #tpu.dot_dimension_numbers<[1], [0], [0], [1], [0, 0, 1, 1], [], []>} : vector<64x9xbf16>, vector<9x64xbf16>, vector<64x64xf32> -> vector<64x64xf32>
    %c0_4 = arith.constant 0 : index
    %c0_5 = arith.constant 0 : index
    %4 = vector.load %arg5[%c0_4, %c0_5] : memref<1x64xf32, #tpu.memory_space<vmem>>, vector<1x64xf32>
    %5 = vector.broadcast %4 : vector<1x64xf32> to vector<64x64xf32>
    %6 = arith.addf %3, %5 : vector<64x64xf32>
    %cst_6 = arith.constant 0.000000e+00 : f32
    %7 = vector.broadcast %cst_6 : f32 to vector<64x64xf32>
    %8 = arith.maximumf %6, %7 : vector<64x64xf32>
    %9 = arith.truncf %8 : vector<64x64xf32> to vector<64x64xbf16>
    %c0_7 = arith.constant 0 : index
    %c0_8 = arith.constant 0 : index
    %10 = vector.load %arg6[%c0_7, %c0_8] : memref<64x64xbf16, #tpu.memory_space<vmem>>, vector<64x64xbf16>
    %cst_9 = arith.constant dense<0.000000e+00> : vector<64x64xf32>
    %11 = tpu.matmul %9, %10, %cst_9 {dimension_numbers = #tpu.dot_dimension_numbers<[1], [0], [0], [1], [0, 0, 1, 1], [], []>} : vector<64x64xbf16>, vector<64x64xbf16>, vector<64x64xf32> -> vector<64x64xf32>
    %c0_10 = arith.constant 0 : index
    %c0_11 = arith.constant 0 : index
    %12 = vector.load %arg7[%c0_10, %c0_11] : memref<1x64xf32, #tpu.memory_space<vmem>>, vector<1x64xf32>
    %13 = vector.broadcast %12 : vector<1x64xf32> to vector<64x64xf32>
    %14 = arith.addf %11, %13 : vector<64x64xf32>
    %cst_12 = arith.constant 0.000000e+00 : f32
    %15 = vector.broadcast %cst_12 : f32 to vector<64x64xf32>
    %16 = arith.maximumf %14, %15 : vector<64x64xf32>
    %17 = arith.truncf %16 : vector<64x64xf32> to vector<64x64xbf16>
    %c0_13 = arith.constant 0 : index
    %c0_14 = arith.constant 0 : index
    %18 = vector.load %arg8[%c0_13, %c0_14] : memref<64x64xbf16, #tpu.memory_space<vmem>>, vector<64x64xbf16>
    %cst_15 = arith.constant dense<0.000000e+00> : vector<64x64xf32>
    %19 = tpu.matmul %17, %18, %cst_15 {dimension_numbers = #tpu.dot_dimension_numbers<[1], [0], [0], [1], [0, 0, 1, 1], [], []>} : vector<64x64xbf16>, vector<64x64xbf16>, vector<64x64xf32> -> vector<64x64xf32>
    %c0_16 = arith.constant 0 : index
    %c0_17 = arith.constant 0 : index
    %20 = vector.load %arg9[%c0_16, %c0_17] : memref<1x64xf32, #tpu.memory_space<vmem>>, vector<1x64xf32>
    %21 = vector.broadcast %20 : vector<1x64xf32> to vector<64x64xf32>
    %22 = arith.addf %19, %21 : vector<64x64xf32>
    %cst_18 = arith.constant 0.000000e+00 : f32
    %23 = vector.broadcast %cst_18 : f32 to vector<64x64xf32>
    %24 = arith.maximumf %22, %23 : vector<64x64xf32>
    %25 = arith.truncf %24 : vector<64x64xf32> to vector<64x64xbf16>
    %c0_19 = arith.constant 0 : index
    %c0_20 = arith.constant 0 : index
    %26 = vector.load %arg10[%c0_19, %c0_20] : memref<64x128xbf16, #tpu.memory_space<vmem>>, vector<64x128xbf16>
    %cst_21 = arith.constant dense<0.000000e+00> : vector<64x128xf32>
    %27 = tpu.matmul %25, %26, %cst_21 {dimension_numbers = #tpu.dot_dimension_numbers<[1], [0], [0], [1], [0, 0, 1, 1], [], []>} : vector<64x64xbf16>, vector<64x128xbf16>, vector<64x128xf32> -> vector<64x128xf32>
    %c0_22 = arith.constant 0 : index
    %c0_23 = arith.constant 0 : index
    %28 = vector.load %arg11[%c0_22, %c0_23] : memref<1x128xf32, #tpu.memory_space<vmem>>, vector<1x128xf32>
    %29 = vector.broadcast %28 : vector<1x128xf32> to vector<64x128xf32>
    %30 = arith.addf %27, %29 : vector<64x128xf32>
    %cst_24 = arith.constant 0.000000e+00 : f32
    %31 = vector.broadcast %cst_24 : f32 to vector<64x128xf32>
    %32 = arith.maximumf %30, %31 : vector<64x128xf32>
    %33 = arith.truncf %32 : vector<64x128xf32> to vector<64x128xbf16>
    %c0_25 = arith.constant 0 : index
    %c0_26 = arith.constant 0 : index
    %34 = vector.load %arg12[%c0_25, %c0_26] : memref<128x1024xbf16, #tpu.memory_space<vmem>>, vector<128x1024xbf16>
    %cst_27 = arith.constant dense<0.000000e+00> : vector<64x1024xf32>
    %35 = tpu.matmul %33, %34, %cst_27 {dimension_numbers = #tpu.dot_dimension_numbers<[1], [0], [0], [1], [0, 0, 1, 1], [], []>} : vector<64x128xbf16>, vector<128x1024xbf16>, vector<64x1024xf32> -> vector<64x1024xf32>
    %c0_28 = arith.constant 0 : index
    %c0_29 = arith.constant 0 : index
    %36 = vector.load %arg13[%c0_28, %c0_29] : memref<1x1024xf32, #tpu.memory_space<vmem>>, vector<1x1024xf32>
    %37 = vector.broadcast %36 : vector<1x1024xf32> to vector<64x1024xf32>
    %38 = arith.addf %35, %37 : vector<64x1024xf32>
    %cst_30 = arith.constant 0.000000e+00 : f32
    %39 = vector.broadcast %cst_30 : f32 to vector<64x1024xf32>
    %40 = arith.maximumf %38, %39 : vector<64x1024xf32>
    %41 = arith.truncf %40 : vector<64x1024xf32> to vector<64x1024xbf16>
    %c0_31 = arith.constant 0 : index
    %c0_32 = arith.constant 0 : index
    %c0_33 = arith.constant 0 : index
    %42 = vector.load %arg14[%c0_31, %c0_32, %c0_33] : memref<1x64x1024xbf16, #tpu.memory_space<vmem>>, vector<1x64x1024xbf16>
    %43 = vector.shape_cast %42 : vector<1x64x1024xbf16> to vector<64x1024xbf16>
    %44 = vector.shape_cast %41 : vector<64x1024xbf16> to vector<1x64x1024xbf16>
    tpu.vector_store %arg14[%c0_31, %c0_32, %c0_33], %44 {strides = array<i32>} : memref<1x64x1024xbf16, #tpu.memory_space<vmem>>, vector<1x64x1024xbf16>,
    %cst_34 = arith.constant dense<0xFF800000> : vector<1024xf32>
    %45 = vector.multi_reduction <maximumf>, %40, %cst_34 [0] : vector<64x1024xf32> to vector<1024xf32>
    %46 = vector.shape_cast %45 : vector<1024xf32> to vector<1x1024xf32>
    %c0_i32 = arith.constant 0 : i32
    %47 = arith.cmpi eq, %arg2, %c0_i32 : i32
    %48 = arith.extui %47 : i1 to i32
    %c0_i32_35 = arith.constant 0 : i32
    %49 = arith.cmpi ne, %48, %c0_i32_35 : i32
    scf.if %49 {
      %c0_38 = arith.constant 0 : index
      %c0_39 = arith.constant 0 : index
      %c0_40 = arith.constant 0 : index
      %c0_41 = arith.constant 0 : index
      %53 = vector.load %arg15[%c0_38, %c0_39, %c0_40, %c0_41] : memref<1x1x1x1024xf32, #tpu.memory_space<vmem>>, vector<1x1x1x1024xf32>
      %54 = vector.shape_cast %53 : vector<1x1x1x1024xf32> to vector<1x1024xf32>
      %55 = vector.shape_cast %46 : vector<1x1024xf32> to vector<1x1x1x1024xf32>
      tpu.vector_store %arg15[%c0_38, %c0_39, %c0_40, %c0_41], %55 {strides = array<i32>} : memref<1x1x1x1024xf32, #tpu.memory_space<vmem>>, vector<1x1x1x1024xf32>,
    } else {
    }
    %c0_i32_36 = arith.constant 0 : i32
    %50 = arith.cmpi sgt, %arg2, %c0_i32_36 : i32
    %51 = arith.extui %50 : i1 to i32
    %c0_i32_37 = arith.constant 0 : i32
    %52 = arith.cmpi ne, %51, %c0_i32_37 : i32
    scf.if %52 {
      %c0_38 = arith.constant 0 : index
      %c0_39 = arith.constant 0 : index
      %c0_40 = arith.constant 0 : index
      %c0_41 = arith.constant 0 : index
      %53 = vector.load %arg15[%c0_38, %c0_39, %c0_40, %c0_41] : memref<1x1x1x1024xf32, #tpu.memory_space<vmem>>, vector<1x1x1x1024xf32>
      %54 = vector.shape_cast %53 : vector<1x1x1x1024xf32> to vector<1x1024xf32>
      %55 = arith.maximumf %54, %46 : vector<1x1024xf32>
      %c0_42 = arith.constant 0 : index
      %c0_43 = arith.constant 0 : index
      %c0_44 = arith.constant 0 : index
      %c0_45 = arith.constant 0 : index
      %56 = vector.load %arg15[%c0_42, %c0_43, %c0_44, %c0_45] : memref<1x1x1x1024xf32, #tpu.memory_space<vmem>>, vector<1x1x1x1024xf32>
      %57 = vector.shape_cast %56 : vector<1x1x1x1024xf32> to vector<1x1024xf32>
      %58 = vector.shape_cast %55 : vector<1x1024xf32> to vector<1x1x1x1024xf32>
      tpu.vector_store %arg15[%c0_42, %c0_43, %c0_44, %c0_45], %58 {strides = array<i32>} : memref<1x1x1x1024xf32, #tpu.memory_space<vmem>>, vector<1x1x1x1024xf32>,
    } else {
    }
    return
  }
  func.func @transform_0(%arg0: i32, %arg1: i32, %arg2: i32) -> (i32, i32, i32) {
    %c1_i32 = arith.constant 1 : i32
    %0 = arith.muli %arg1, %c1_i32 : i32
    %1 = arith.addi %0, %arg2 : i32
    %c0_i32 = arith.constant 0 : i32
    %c0_i32_0 = arith.constant 0 : i32
    return %arg0, %1, %c0_i32 : i32, i32, i32
  }
  func.func @transform_1(%arg0: i32, %arg1: i32, %arg2: i32) -> (i32, i32) {
    %c0_i32 = arith.constant 0 : i32
    %c0_i32_0 = arith.constant 0 : i32
    %c0_i32_1 = arith.constant 0 : i32
    return %c0_i32, %c0_i32_0 : i32, i32
  }
  func.func @transform_2(%arg0: i32, %arg1: i32, %arg2: i32) -> (i32, i32) {
    %c0_i32 = arith.constant 0 : i32
    %c0_i32_0 = arith.constant 0 : i32
    %c0_i32_1 = arith.constant 0 : i32
    return %c0_i32, %c0_i32_0 : i32, i32
  }
  func.func @transform_3(%arg0: i32, %arg1: i32, %arg2: i32) -> (i32, i32) {
    %c0_i32 = arith.constant 0 : i32
    %c0_i32_0 = arith.constant 0 : i32
    %c0_i32_1 = arith.constant 0 : i32
    return %c0_i32, %c0_i32_0 : i32, i32
  }
  func.func @transform_4(%arg0: i32, %arg1: i32, %arg2: i32) -> (i32, i32) {
    %c0_i32 = arith.constant 0 : i32
    %c0_i32_0 = arith.constant 0 : i32
    %c0_i32_1 = arith.constant 0 : i32
    return %c0_i32, %c0_i32_0 : i32, i32
  }
  func.func @transform_5(%arg0: i32, %arg1: i32, %arg2: i32) -> (i32, i32) {
    %c0_i32 = arith.constant 0 : i32
    %c0_i32_0 = arith.constant 0 : i32
    %c0_i32_1 = arith.constant 0 : i32
    return %c0_i32, %c0_i32_0 : i32, i32
  }
  func.func @transform_6(%arg0: i32, %arg1: i32, %arg2: i32) -> (i32, i32) {
    %c0_i32 = arith.constant 0 : i32
    %c0_i32_0 = arith.constant 0 : i32
    %c0_i32_1 = arith.constant 0 : i32
    return %c0_i32, %c0_i32_0 : i32, i32
  }
  func.func @transform_7(%arg0: i32, %arg1: i32, %arg2: i32) -> (i32, i32) {
    %c0_i32 = arith.constant 0 : i32
    %c0_i32_0 = arith.constant 0 : i32
    %c0_i32_1 = arith.constant 0 : i32
    return %c0_i32, %c0_i32_0 : i32, i32
  }
  func.func @transform_8(%arg0: i32, %arg1: i32, %arg2: i32) -> (i32, i32) {
    %c0_i32 = arith.constant 0 : i32
    %c0_i32_0 = arith.constant 0 : i32
    %c0_i32_1 = arith.constant 0 : i32
    return %c0_i32, %c0_i32_0 : i32, i32
  }
  func.func @transform_9(%arg0: i32, %arg1: i32, %arg2: i32) -> (i32, i32) {
    %c0_i32 = arith.constant 0 : i32
    %c0_i32_0 = arith.constant 0 : i32
    %c0_i32_1 = arith.constant 0 : i32
    return %c0_i32, %c0_i32_0 : i32, i32
  }
  func.func @transform_10(%arg0: i32, %arg1: i32, %arg2: i32) -> (i32, i32) {
    %c0_i32 = arith.constant 0 : i32
    %c0_i32_0 = arith.constant 0 : i32
    %c0_i32_1 = arith.constant 0 : i32
    return %c0_i32, %c0_i32_0 : i32, i32
  }
  func.func @transform_11(%arg0: i32, %arg1: i32, %arg2: i32) -> (i32, i32, i32) {
    %c1_i32 = arith.constant 1 : i32
    %0 = arith.muli %arg1, %c1_i32 : i32
    %1 = arith.addi %0, %arg2 : i32
    %c0_i32 = arith.constant 0 : i32
    %c0_i32_0 = arith.constant 0 : i32
    return %arg0, %1, %c0_i32 : i32, i32, i32
  }
  func.func @transform_12(%arg0: i32, %arg1: i32, %arg2: i32) -> (i32, i32, i32, i32) {
    %c0_i32 = arith.constant 0 : i32
    %c0_i32_0 = arith.constant 0 : i32
    %c0_i32_1 = arith.constant 0 : i32
    return %arg0, %arg1, %c0_i32, %c0_i32_0 : i32, i32, i32, i32
  }
}

</mosaic_0001>

<llo_original>
// kernel: tpu_custom_call.1
$region0: #{tpu_custom_call.1}
  #allocation0 [shape = 'u32[]', space=smem, size = 0x4, offset = 0x4, fixed_abs, tag = 'smem constant byte address 0x4 - core index']
  #allocation1 [shape = 'u32[144,128]{1,0:T(1,128)}', space=vmem, size = 0x12000, scoped, tag = 'internal scratch']
  %s0 = inlined_call_operand.vmem [shape: bf16[2,64,9], index: 0, kind: input, shape index: {}]
  %s1 = inlined_call_operand.hbm [shape: bf16[9,64], index: 1, kind: input, shape index: {}]
  %s2 = inlined_call_operand.vmem [shape: f32[1,64], index: 2, kind: input, shape index: {}]
  %s3 = inlined_call_operand.vmem [shape: bf16[64,64], index: 3, kind: input, shape index: {}]
  %s4 = inlined_call_operand.vmem [shape: f32[1,64], index: 4, kind: input, shape index: {}]
  %s5 = inlined_call_operand.vmem [shape: bf16[64,64], index: 5, kind: input, shape index: {}]
  %s6 = inlined_call_operand.vmem [shape: f32[1,64], index: 6, kind: input, shape index: {}]
  %s7 = inlined_call_operand.vmem [shape: bf16[64,128], index: 7, kind: input, shape index: {}]
  %s8 = inlined_call_operand.hbm [shape: f32[1,128], index: 8, kind: input, shape index: {}]
  %s9 = inlined_call_operand.hbm [shape: bf16[128,1024], index: 9, kind: input, shape index: {}]
  %s10 = inlined_call_operand.vmem [shape: f32[1,1024], index: 10, kind: input, shape index: {}]
  %s11 = inlined_call_operand.hbm [shape: bf16[2,64,1024], index: 11, kind: output, shape index: {0}]
  %s12 = inlined_call_operand.hbm [shape: f32[2,1,1,1024], index: 12, kind: output, shape index: {1}]
  %13 = xla_tuple %s11, %s12
  %s14 = sld [smem:[#allocation0]]
  $region105: #{tpu_custom_call.1} parent=0
    _
  %s16 = ssub.s32 1, %s14
  %s17 = scalar_select 0, %s16, %s14
  $region1: #{tpu_custom_call.1} parent=0
    #allocation2 [shape = 'u8[4096]{0}', space=vmem, size = 0x1000, scoped, tag = 'input window, operand 1, single buffered']
    #allocation3 [shape = 's32[2]{0}', space=sflag, size = 0x8, scoped, tag = 'scoped memory for tpu_custom_call.1']
    #allocation4 [shape = 's32[2]{0}', space=sflag, size = 0x8, scoped, tag = 'scoped memory for tpu_custom_call.1']
    #allocation5 [shape = 'u8[512]{0}', space=vmem, size = 0x400, scoped, tag = 'input window, operand 8, single buffered']
    #allocation6 [shape = 's32[1]{0}', space=sflag, size = 0x4, scoped, tag = 'scoped memory for tpu_custom_call.1']
    #allocation7 [shape = 'u8[262144]{0}', space=vmem, size = 0x40000, scoped, tag = 'input window, operand 9, single buffered']
    #allocation8 [shape = 'u8[262144]{0}', space=vmem, size = 0x40000, scoped, tag = 'output window, operand 0']
    #allocation9 [shape = 'u8[8192]{0}', space=vmem, size = 0x2000, scoped, tag = 'output window, operand 1']
    #allocation10 [shape = 's32[2]{0}', space=sflag, size = 0x8, scoped, tag = 'scoped memory for tpu_custom_call.1']
    %18 = vsyncpa [#allocation3], 0
    %19 = vsyncpa [#allocation6], 0
    %20 = vsyncpa [#allocation4], 0
    %s21 = scalar_lea.sflag [#allocation4], 1
    %22 = vsyncpa %s21, 0
    %23 = vsyncpa [#allocation10], 0
    %s24 = scalar_lea.sflag [#allocation10], 1
    %25 = vsyncpa %s24, 0
    loop: start=0, step=1, limit=4
    $region2: #{tpu_custom_call.1} parent=1 // loop_pre_header
      _
    $region3: #{tpu_custom_call.1} parent=1 // loop_header
      %s27 = sphi 0, %s31
      %p28 = scmp.ge.s32.totalorder %s27, 4
      %s34 = sphi 0, %s53
      %s35 = sphi 0, %s49
      %s36 = sphi 0, %s45
      %s37 = sphi 0, %s34
      %s38 = sphi 0, %s35
      %s39 = sphi 0, %s36
      %s40 = sphi 0, %s37
      %s41 = sphi 0, %s38
      %s42 = sphi 0, %s39
      %s60 = sphi 0, %s62
      %s63 = sphi 0, %s60
      %s64 = sphi 0, %s63
      %s80 = sphi 0, %s64
      %s84 = sphi 0, %s84
      %s86 = sphi 0, %s84
      %s87 = sphi 0, %s86
      %s101 = sphi 0, %s87
      %s105 = sphi 0, %s105
      %s107 = sphi 0, %s105
      %s108 = sphi 0, %s107
      %s122 = sphi 0, %s108
      %s126 = sphi 0, %s126
      %s128 = sphi 0, %s126
      %s129 = sphi 0, %s128
      %s143 = sphi 0, %s129
      %s147 = sphi 0, %s147
      %s149 = sphi 0, %s147
      %s150 = sphi 0, %s149
      %s164 = sphi 0, %s150
      %s168 = sphi 0, %s168
      %s170 = sphi 0, %s168
      %s171 = sphi 0, %s170
      %s185 = sphi 0, %s171
      %s189 = sphi 0, %s189
      %s191 = sphi 0, %s189
      %s192 = sphi 0, %s191
      %s206 = sphi 0, %s192
      %s210 = sphi 0, %s210
      %s212 = sphi 0, %s210
      %s213 = sphi 0, %s212
      %s227 = sphi 0, %s213
      %s231 = sphi 0, %s231
      %s233 = sphi 0, %s231
      %s234 = sphi 0, %s233
      %s248 = sphi 0, %s234
      %s252 = sphi 0, %s252
      %s254 = sphi 0, %s252
      %s255 = sphi 0, %s254
      %s269 = sphi 0, %s255
      %s273 = sphi 0, %s273
      %s275 = sphi 0, %s273
      %s276 = sphi 0, %s275
      %s290 = sphi 0, %s276
      %s300 = sphi 0, %s302
      %s303 = sphi 0, %s300
      %s304 = sphi 0, %s303
      %s320 = sphi 0, %s304
      %s328 = sphi 0, %s330
      %s331 = sphi 0, %s328
      %s332 = sphi 0, %s331
      %s348 = sphi 0, %s332
    $region4: #{tpu_custom_call.1} parent=1 // loop_header_branch
      %30 = sbr.rel (%p28) target = $region8
    $region5: #{tpu_custom_call.1} parent=1 // loop_body
      %s32 = ssub.s32 %s27, 1
      %s33 = ssub.s32 %s27, 2
      %s43 = sadd.s32 1, %s36
      %p44 = scmp.ge.s32.totalorder %s43, 1
      %s45 = scalar_select %p44, 0, %s43
      %s46 = sadd.s32 1, %s35
      %s47 = scalar_select %p44, %s46, %s35
      %p48 = scmp.ge.s32.totalorder %s47, 1
      %s49 = scalar_select %p48, 0, %s47
      %s50 = sadd.s32 1, %s34
      %s51 = scalar_select %p48, %s50, %s34
      %p52 = scmp.ge.s32.totalorder %s51, 2
      %s53 = scalar_select %p52, 0, %s51
      %s54 = sadd.s32 %s35, %s36
      %s55 = sadd.s32 %s49, %s45
      %s56 = ssub.s32 %s34, %s53
      %s57 = ssub.s32 %s54, %s55
      %s58 = sor.u32 %s56, %s57
      %p59 = scmp.eq.s32.totalorder %s58, 0
      %s61 = sadd.s32 %s60, 1
      %s62 = scalar_select %p59, %s60, %s61
      %p65 = pneg %p59
      %p66 = scmp.eq.s32.totalorder %s27, 1
      %p67 = por %p65, %p66
      %p68 = scmp.ne.s32.totalorder %s60, %s63
      %p69 = scmp.eq.s32.totalorder %s27, 0
      %p70 = por %p68, %p69
      %p71 = scmp.ne.s32.totalorder %s60, %s63
      %p72 = scmp.eq.s32.totalorder %s32, 1
      %p73 = por %p71, %p72
      %p74 = scmp.ne.s32.totalorder %s63, %s64
      %p75 = scmp.eq.s32.totalorder %s32, 0
      %p76 = por %p74, %p75
      %p77 = scmp.ne.s32.totalorder %s63, %s64
      %p78 = scmp.eq.s32.totalorder %s33, 1
      %p79 = por %p77, %p78
      %p81 = scmp.ne.s32.totalorder %s64, %s80
      %p82 = scmp.eq.s32.totalorder %s33, 0
      %p83 = por %p81, %p82
      %s85 = sadd.s32 %s84, 1
      %p88 = scmp.eq.s32.totalorder %s27, 1
      %p89 = scmp.ne.s32.totalorder %s84, %s86
      %p90 = scmp.eq.s32.totalorder %s27, 0
      %p91 = por %p89, %p90
      %p92 = scmp.ne.s32.totalorder %s84, %s86
      %p93 = scmp.eq.s32.totalorder %s32, 1
      %p94 = por %p92, %p93
      %p95 = scmp.ne.s32.totalorder %s86, %s87
      %p96 = scmp.eq.s32.totalorder %s32, 0
      %p97 = por %p95, %p96
      %p98 = scmp.ne.s32.totalorder %s86, %s87
      %p99 = scmp.eq.s32.totalorder %s33, 1
      %p100 = por %p98, %p99
      %p102 = scmp.ne.s32.totalorder %s87, %s101
      %p103 = scmp.eq.s32.totalorder %s33, 0
      %p104 = por %p102, %p103
      %s106 = sadd.s32 %s105, 1
      %p109 = scmp.eq.s32.totalorder %s27, 1
      %p110 = scmp.ne.s32.totalorder %s105, %s107
      %p111 = scmp.eq.s32.totalorder %s27, 0
      %p112 = por %p110, %p111
      %p113 = scmp.ne.s32.totalorder %s105, %s107
      %p114 = scmp.eq.s32.totalorder %s32, 1
      %p115 = por %p113, %p114
      %p116 = scmp.ne.s32.totalorder %s107, %s108
      %p117 = scmp.eq.s32.totalorder %s32, 0
      %p118 = por %p116, %p117
      %p119 = scmp.ne.s32.totalorder %s107, %s108
      %p120 = scmp.eq.s32.totalorder %s33, 1
      %p121 = por %p119, %p120
      %p123 = scmp.ne.s32.totalorder %s108, %s122
      %p124 = scmp.eq.s32.totalorder %s33, 0
      %p125 = por %p123, %p124
      %s127 = sadd.s32 %s126, 1
      %p130 = scmp.eq.s32.totalorder %s27, 1
      %p131 = scmp.ne.s32.totalorder %s126, %s128
      %p132 = scmp.eq.s32.totalorder %s27, 0
      %p133 = por %p131, %p132
      %p134 = scmp.ne.s32.totalorder %s126, %s128
      %p135 = scmp.eq.s32.totalorder %s32, 1
      %p136 = por %p134, %p135
      %p137 = scmp.ne.s32.totalorder %s128, %s129
      %p138 = scmp.eq.s32.totalorder %s32, 0
      %p139 = por %p137, %p138
      %p140 = scmp.ne.s32.totalorder %s128, %s129
      %p141 = scmp.eq.s32.totalorder %s33, 1
      %p142 = por %p140, %p141
      %p144 = scmp.ne.s32.totalorder %s129, %s143
      %p145 = scmp.eq.s32.totalorder %s33, 0
      %p146 = por %p144, %p145
      %s148 = sadd.s32 %s147, 1
      %p151 = scmp.eq.s32.totalorder %s27, 1
      %p152 = scmp.ne.s32.totalorder %s147, %s149
      %p153 = scmp.eq.s32.totalorder %s27, 0
      %p154 = por %p152, %p153
      %p155 = scmp.ne.s32.totalorder %s147, %s149
      %p156 = scmp.eq.s32.totalorder %s32, 1
      %p157 = por %p155, %p156
      %p158 = scmp.ne.s32.totalorder %s149, %s150
      %p159 = scmp.eq.s32.totalorder %s32, 0
      %p160 = por %p158, %p159
      %p161 = scmp.ne.s32.totalorder %s149, %s150
      %p162 = scmp.eq.s32.totalorder %s33, 1
      %p163 = por %p161, %p162
      %p165 = scmp.ne.s32.totalorder %s150, %s164
      %p166 = scmp.eq.s32.totalorder %s33, 0
      %p167 = por %p165, %p166
      %s169 = sadd.s32 %s168, 1
      %p172 = scmp.eq.s32.totalorder %s27, 1
      %p173 = scmp.ne.s32.totalorder %s168, %s170
      %p174 = scmp.eq.s32.totalorder %s27, 0
      %p175 = por %p173, %p174
      %p176 = scmp.ne.s32.totalorder %s168, %s170
      %p177 = scmp.eq.s32.totalorder %s32, 1
      %p178 = por %p176, %p177
      %p179 = scmp.ne.s32.totalorder %s170, %s171
      %p180 = scmp.eq.s32.totalorder %s32, 0
      %p181 = por %p179, %p180
      %p182 = scmp.ne.s32.totalorder %s170, %s171
      %p183 = scmp.eq.s32.totalorder %s33, 1
      %p184 = por %p182, %p183
      %p186 = scmp.ne.s32.totalorder %s171, %s185
      %p187 = scmp.eq.s32.totalorder %s33, 0
      %p188 = por %p186, %p187
      %s190 = sadd.s32 %s189, 1
      %p193 = scmp.eq.s32.totalorder %s27, 1
      %p194 = scmp.ne.s32.totalorder %s189, %s191
      %p195 = scmp.eq.s32.totalorder %s27, 0
      %p196 = por %p194, %p195
      %p197 = scmp.ne.s32.totalorder %s189, %s191
      %p198 = scmp.eq.s32.totalorder %s32, 1
      %p199 = por %p197, %p198
      %p200 = scmp.ne.s32.totalorder %s191, %s192
      %p201 = scmp.eq.s32.totalorder %s32, 0
      %p202 = por %p200, %p201
      %p203 = scmp.ne.s32.totalorder %s191, %s192
      %p204 = scmp.eq.s32.totalorder %s33, 1
      %p205 = por %p203, %p204
      %p207 = scmp.ne.s32.totalorder %s192, %s206
      %p208 = scmp.eq.s32.totalorder %s33, 0
      %p209 = por %p207, %p208
      %s211 = sadd.s32 %s210, 1
      %p214 = scmp.eq.s32.totalorder %s27, 1
      %p215 = scmp.ne.s32.totalorder %s210, %s212
      %p216 = scmp.eq.s32.totalorder %s27, 0
      %p217 = por %p215, %p216
      %p218 = scmp.ne.s32.totalorder %s210, %s212
      %p219 = scmp.eq.s32.totalorder %s32, 1
      %p220 = por %p218, %p219
      %p221 = scmp.ne.s32.totalorder %s212, %s213
      %p222 = scmp.eq.s32.totalorder %s32, 0
      %p223 = por %p221, %p222
      %p224 = scmp.ne.s32.totalorder %s212, %s213
      %p225 = scmp.eq.s32.totalorder %s33, 1
      %p226 = por %p224, %p225
      %p228 = scmp.ne.s32.totalorder %s213, %s227
      %p229 = scmp.eq.s32.totalorder %s33, 0
      %p230 = por %p228, %p229
      %s232 = sadd.s32 %s231, 1
      %p235 = scmp.eq.s32.totalorder %s27, 1
      %p236 = scmp.ne.s32.totalorder %s231, %s233
      %p237 = scmp.eq.s32.totalorder %s27, 0
      %p238 = por %p236, %p237
      %p239 = scmp.ne.s32.totalorder %s231, %s233
      %p240 = scmp.eq.s32.totalorder %s32, 1
      %p241 = por %p239, %p240
      %p242 = scmp.ne.s32.totalorder %s233, %s234
      %p243 = scmp.eq.s32.totalorder %s32, 0
      %p244 = por %p242, %p243
      %p245 = scmp.ne.s32.totalorder %s233, %s234
      %p246 = scmp.eq.s32.totalorder %s33, 1
      %p247 = por %p245, %p246
      %p249 = scmp.ne.s32.totalorder %s234, %s248
      %p250 = scmp.eq.s32.totalorder %s33, 0
      %p251 = por %p249, %p250
      %s253 = sadd.s32 %s252, 1
      %p256 = scmp.eq.s32.totalorder %s27, 1
      %p257 = scmp.ne.s32.totalorder %s252, %s254
      %p258 = scmp.eq.s32.totalorder %s27, 0
      %p259 = por %p257, %p258
      %p260 = scmp.ne.s32.totalorder %s252, %s254
      %p261 = scmp.eq.s32.totalorder %s32, 1
      %p262 = por %p260, %p261
      %p263 = scmp.ne.s32.totalorder %s254, %s255
      %p264 = scmp.eq.s32.totalorder %s32, 0
      %p265 = por %p263, %p264
      %p266 = scmp.ne.s32.totalorder %s254, %s255
      %p267 = scmp.eq.s32.totalorder %s33, 1
      %p268 = por %p266, %p267
      %p270 = scmp.ne.s32.totalorder %s255, %s269
      %p271 = scmp.eq.s32.totalorder %s33, 0
      %p272 = por %p270, %p271
      %s274 = sadd.s32 %s273, 1
      %p277 = scmp.eq.s32.totalorder %s27, 1
      %p278 = scmp.ne.s32.totalorder %s273, %s275
      %p279 = scmp.eq.s32.totalorder %s27, 0
      %p280 = por %p278, %p279
      %p281 = scmp.ne.s32.totalorder %s273, %s275
      %p282 = scmp.eq.s32.totalorder %s32, 1
      %p283 = por %p281, %p282
      %p284 = scmp.ne.s32.totalorder %s275, %s276
      %p285 = scmp.eq.s32.totalorder %s32, 0
      %p286 = por %p284, %p285
      %p287 = scmp.ne.s32.totalorder %s275, %s276
      %p288 = scmp.eq.s32.totalorder %s33, 1
      %p289 = por %p287, %p288
      %p291 = scmp.ne.s32.totalorder %s276, %s290
      %p292 = scmp.eq.s32.totalorder %s33, 0
      %p293 = por %p291, %p292
      %s294 = sadd.s32 %s35, %s36
      %s295 = sadd.s32 %s49, %s45
      %s296 = ssub.s32 %s34, %s53
      %s297 = ssub.s32 %s294, %s295
      %s298 = sor.u32 %s296, %s297
      %p299 = scmp.eq.s32.totalorder %s298, 0
      %s301 = sadd.s32 %s300, 1
      %s302 = scalar_select %p299, %s300, %s301
      %p305 = pneg %p299
      %p306 = scmp.eq.s32.totalorder %s27, 1
      %p307 = por %p305, %p306
      %p308 = scmp.ne.s32.totalorder %s300, %s303
      %p309 = scmp.eq.s32.totalorder %s27, 0
      %p310 = por %p308, %p309
      %p311 = scmp.ne.s32.totalorder %s300, %s303
      %p312 = scmp.eq.s32.totalorder %s32, 1
      %p313 = por %p311, %p312
      %p314 = scmp.ne.s32.totalorder %s303, %s304
      %p315 = scmp.eq.s32.totalorder %s32, 0
      %p316 = por %p314, %p315
      %p317 = scmp.ne.s32.totalorder %s303, %s304
      %p318 = scmp.eq.s32.totalorder %s33, 1
      %p319 = por %p317, %p318
      %p321 = scmp.ne.s32.totalorder %s304, %s320
      %p322 = scmp.eq.s32.totalorder %s33, 0
      %p323 = por %p321, %p322
      %s324 = ssub.s32 %s34, %s53
      %s325 = ssub.s32 %s35, %s49
      %s326 = sor.u32 %s324, %s325
      %p327 = scmp.eq.s32.totalorder %s326, 0
      %s329 = sadd.s32 %s328, 1
      %s330 = scalar_select %p327, %s328, %s329
      %p333 = pneg %p327
      %p334 = scmp.eq.s32.totalorder %s27, 1
      %p335 = por %p333, %p334
      %p336 = scmp.ne.s32.totalorder %s328, %s331
      %p337 = scmp.eq.s32.totalorder %s27, 0
      %p338 = por %p336, %p337
      %p339 = scmp.ne.s32.totalorder %s328, %s331
      %p340 = scmp.eq.s32.totalorder %s32, 1
      %p341 = por %p339, %p340
      %p342 = scmp.ne.s32.totalorder %s331, %s332
      %p343 = scmp.eq.s32.totalorder %s32, 0
      %p344 = por %p342, %p343
      %p345 = scmp.ne.s32.totalorder %s331, %s332
      %p346 = scmp.eq.s32.totalorder %s33, 1
      %p347 = por %p345, %p346
      %p349 = scmp.ne.s32.totalorder %s332, %s348
      %p350 = scmp.eq.s32.totalorder %s33, 0
      %p351 = por %p349, %p350
      %p352 = scmp.le.s32.totalorder 1, %s27
      %p353 = scmp.lt.s32.totalorder %s27, 3
      %p354 = pnand %p352, %p353
      %p355 = pneg %p354
      // Predicated region
      $region9: #{tpu_custom_call.1} parent=5 // pred_check
        _
      $region10: #{tpu_custom_call.1} parent=5 // pred_check_branch
        %357 = sbr.rel (%p354) target = $region12
      $region11: #{tpu_custom_call.1} parent=5 // pred_region
        %s358 = ssub.s32 %s27, 1
        // Predicated region
        $region13: #{tpu_custom_call.1} parent=11 // pred_check
          %p359 = pneg %p97
        $region14: #{tpu_custom_call.1} parent=11 // pred_check_branch
          %361 = sbr.rel (%p359) target = $region16
        $region15: #{tpu_custom_call.1} parent=11 // pred_region
          %s363 = ssub.s32 128, 128
          %364 = vsyncadd [#allocation3], %s363
          %s365 = sshll.u32 [#allocation2], 4
          %s366 = int_to_ptr.vmem [resolvable:$true] %s365
          %371 = dma.hbm_to_vmem [thread:$0]  %s1, 128, %s366, [#allocation3], 64, 64, 4
        $region16: #{tpu_custom_call.1} parent=11 // pred_fallthru
          _
        // Predicated region
        $region17: #{tpu_custom_call.1} parent=11 // pred_check
          %p372 = pneg %p118
        $region18: #{tpu_custom_call.1} parent=11 // pred_check_branch
          %374 = sbr.rel (%p372) target = $region20
        $region19: #{tpu_custom_call.1} parent=11 // pred_region
          _
        $region20: #{tpu_custom_call.1} parent=11 // pred_fallthru
          _
        // Predicated region
        $region21: #{tpu_custom_call.1} parent=11 // pred_check
          %p375 = pneg %p139
        $region22: #{tpu_custom_call.1} parent=11 // pred_check_branch
          %377 = sbr.rel (%p375) target = $region24
        $region23: #{tpu_custom_call.1} parent=11 // pred_region
          _
        $region24: #{tpu_custom_call.1} parent=11 // pred_fallthru
          _
        // Predicated region
        $region25: #{tpu_custom_call.1} parent=11 // pred_check
          %p378 = pneg %p160
        $region26: #{tpu_custom_call.1} parent=11 // pred_check_branch
          %380 = sbr.rel (%p378) target = $region28
        $region27: #{tpu_custom_call.1} parent=11 // pred_region
          _
        $region28: #{tpu_custom_call.1} parent=11 // pred_fallthru
          _
        // Predicated region
        $region29: #{tpu_custom_call.1} parent=11 // pred_check
          %p381 = pneg %p181
        $region30: #{tpu_custom_call.1} parent=11 // pred_check_branch
          %383 = sbr.rel (%p381) target = $region32
        $region31: #{tpu_custom_call.1} parent=11 // pred_region
          _
        $region32: #{tpu_custom_call.1} parent=11 // pred_fallthru
          _
        // Predicated region
        $region33: #{tpu_custom_call.1} parent=11 // pred_check
          %p384 = pneg %p202
        $region34: #{tpu_custom_call.1} parent=11 // pred_check_branch
          %386 = sbr.rel (%p384) target = $region36
        $region35: #{tpu_custom_call.1} parent=11 // pred_region
          _
        $region36: #{tpu_custom_call.1} parent=11 // pred_fallthru
          _
        // Predicated region
        $region37: #{tpu_custom_call.1} parent=11 // pred_check
          %p387 = pneg %p223
        $region38: #{tpu_custom_call.1} parent=11 // pred_check_branch
          %389 = sbr.rel (%p387) target = $region40
        $region39: #{tpu_custom_call.1} parent=11 // pred_region
          _
        $region40: #{tpu_custom_call.1} parent=11 // pred_fallthru
          _
        // Predicated region
        $region41: #{tpu_custom_call.1} parent=11 // pred_check
          %p390 = pneg %p244
        $region42: #{tpu_custom_call.1} parent=11 // pred_check_branch
          %392 = sbr.rel (%p390) target = $region44
        $region43: #{tpu_custom_call.1} parent=11 // pred_region
          %s394 = ssub.s32 16, 16
          %395 = vsyncadd [#allocation6], %s394
          %s397 = sshll.u32 [#allocation5], 4
          %s398 = int_to_ptr.vmem [resolvable:$true] %s397
          %400 = dma.hbm_to_vmem [thread:$0]  %s8, 16, %s398, [#allocation6]
        $region44: #{tpu_custom_call.1} parent=11 // pred_fallthru
          _
        // Predicated region
        $region45: #{tpu_custom_call.1} parent=11 // pred_check
          %p401 = pneg %p265
        $region46: #{tpu_custom_call.1} parent=11 // pred_check_branch
          %403 = sbr.rel (%p401) target = $region48
        $region47: #{tpu_custom_call.1} parent=11 // pred_region
          %s405 = ssub.s32 8192, 8192
          %406 = vsyncadd [#allocation6], %s405
          %s407 = sshll.u32 [#allocation7], 4
          %s408 = int_to_ptr.vmem [resolvable:$true] %s407
          %413 = dma.hbm_to_vmem [thread:$0]  %s9, 8192, %s408, [#allocation6], 512, 512, 32
        $region48: #{tpu_custom_call.1} parent=11 // pred_fallthru
          _
        // Predicated region
        $region49: #{tpu_custom_call.1} parent=11 // pred_check
          %p414 = pneg %p286
        $region50: #{tpu_custom_call.1} parent=11 // pred_check_branch
          %416 = sbr.rel (%p414) target = $region52
        $region51: #{tpu_custom_call.1} parent=11 // pred_region
          _
        $region52: #{tpu_custom_call.1} parent=11 // pred_fallthru
          _
      $region12: #{tpu_custom_call.1} parent=5 // pred_fallthru
        _
      %p417 = scmp.lt.s32.totalorder %s27, 2
      // Predicated region
      $region53: #{tpu_custom_call.1} parent=5 // pred_check
        %p418 = pneg %p417
      $region54: #{tpu_custom_call.1} parent=5 // pred_check_branch
        %420 = sbr.rel (%p418) target = $region56
      $region55: #{tpu_custom_call.1} parent=5 // pred_region
        // Predicated region
        $region57: #{tpu_custom_call.1} parent=55 // pred_check
          %p421 = pneg %p70
        $region58: #{tpu_custom_call.1} parent=55 // pred_check_branch
          %423 = sbr.rel (%p421) target = $region60
        $region59: #{tpu_custom_call.1} parent=55 // pred_region
          %s424 = sadd.s32 %s35, %s36
          %s425 = smul.u32 8, %s424
          %p426 = scmp.lt.s32.totalorder %s34, 1
          %s427 = scalar_select %p426, %s34, 1
          %p428 = scmp.lt.s32.totalorder %s425, 7
          %s429 = scalar_select %p428, %s425, 7
          %s430 = smul.addr %s427, 8
          %s431 = sadd.s32 %s429, %s430
          %s432 = smul.addr %s431, 4
          %s433 = scalar_lea.vmem %s0, %s432
          %s434 = sadd.s32 %s35, %s36
          %s435 = smul.u32 8, %s434
        $region60: #{tpu_custom_call.1} parent=55 // pred_fallthru
          _
      $region56: #{tpu_custom_call.1} parent=5 // pred_fallthru
        _
      %p436 = scmp.le.s32.totalorder 1, %s27
      %p437 = scmp.lt.s32.totalorder %s27, 3
      %p438 = pnand %p436, %p437
      %p439 = pneg %p438
      // Predicated region
      $region61: #{tpu_custom_call.1} parent=5 // pred_check
        _
      $region62: #{tpu_custom_call.1} parent=5 // pred_check_branch
        %441 = sbr.rel (%p438) target = $region64
      $region63: #{tpu_custom_call.1} parent=5 // pred_region
        %s442 = ssub.s32 %s27, 1
        // Predicated region
        $region65: #{tpu_custom_call.1} parent=63 // pred_check
          %p443 = pneg %p97
        $region66: #{tpu_custom_call.1} parent=63 // pred_check_branch
          %445 = sbr.rel (%p443) target = $region68
        $region67: #{tpu_custom_call.1} parent=63 // pred_region
          %446 = dma.done [#allocation3], 128
        $region68: #{tpu_custom_call.1} parent=63 // pred_fallthru
          _
        // Predicated region
        $region69: #{tpu_custom_call.1} parent=63 // pred_check
          %p447 = pneg %p244
        $region70: #{tpu_custom_call.1} parent=63 // pred_check_branch
          %449 = sbr.rel (%p447) target = $region72
        $region71: #{tpu_custom_call.1} parent=63 // pred_region
          %450 = dma.done [#allocation6], 16
        $region72: #{tpu_custom_call.1} parent=63 // pred_fallthru
          _
        // Predicated region
        $region73: #{tpu_custom_call.1} parent=63 // pred_check
          %p451 = pneg %p265
        $region74: #{tpu_custom_call.1} parent=63 // pred_check_branch
          %453 = sbr.rel (%p451) target = $region76
        $region75: #{tpu_custom_call.1} parent=63 // pred_region
          %454 = dma.done [#allocation6], 8192
        $region76: #{tpu_custom_call.1} parent=63 // pred_fallthru
          _
        %s455 = sadd.s32 %s38, %s39
        %s456 = smul.u32 8, %s455
        %p457 = scmp.lt.s32.totalorder %s37, 1
        %s458 = scalar_select %p457, %s37, 1
        %p459 = scmp.lt.s32.totalorder %s456, 7
        %s460 = scalar_select %p459, %s456, 7
        %s461 = smul.addr %s458, 8
        %s462 = sadd.s32 %s460, %s461
        %s463 = smul.addr %s462, 4
        %s464 = scalar_lea.vmem %s0, %s463
        %p465 = pneg %p76
        %p466 = pneg %p73
        %p467 = pneg %p97
        %p468 = pneg %p94
        %p469 = pneg %p118
        %p470 = pneg %p115
        %p471 = pneg %p139
        %p472 = pneg %p136
        %p473 = pneg %p160
        %p474 = pneg %p157
        %p475 = pneg %p181
        %p476 = pneg %p178
        %p477 = pneg %p202
        %p478 = pneg %p199
        %p479 = pneg %p223
        %p480 = pneg %p220
        %p481 = pneg %p244
        %p482 = pneg %p241
        %p483 = pneg %p265
        %p484 = pneg %p262
        %p485 = pneg %p286
        %p486 = pneg %p283
        %p487 = pneg %p316
        %p488 = pneg %p313
        %s489 = sand.u32 %s303, 1
        %s490 = scalar_lea.sflag [#allocation4], %s489
        %s491 = sand.u32 %s303, 1
        %s492 = smul.addr %s491, 256
        %s493 = scalar_lea.vmem [#allocation8], %s492
        %p494 = pneg %p344
        %p495 = pneg %p341
        %s496 = sand.u32 %s331, 1
        %s497 = scalar_lea.sflag [#allocation10], %s496
        %s498 = sand.u32 %s331, 1
        %s499 = smul.addr %s498, 8
        %s500 = scalar_lea.vmem [#allocation9], %s499
        %s501 = sadd.s32 %s38, %s39
        %s502 = smul.u32 8, %s501
        %p503 = scmp.lt.s32.totalorder %s37, 1
        %s504 = scalar_select %p503, %s37, 1
        %p505 = scmp.lt.s32.totalorder %s502, 7
        %s506 = scalar_select %p505, %s502, 7
        %s507 = smul.addr %s504, 8
        %s508 = sadd.s32 %s506, %s507
        %s509 = smul.addr %s508, 4
        %s510 = scalar_lea.vmem %s0, %s509
        %s511 = sadd.s32 %s38, %s39
        %s512 = smul.u32 8, %s511
        %s513 = sadd.s32 %s38, %s39
        %s514 = smul.u32 8, %s513
        %v516 = vld [vmem:[%s510] sm:$0xf]
        %v517 = vld [vmem:[%s510 + $0x4] sm:$0xf]
        %v518 = vld [vmem:[%s510 + $0x8] sm:$0xf]
        %v519 = vld [vmem:[%s510 + $0xc] sm:$0xf]
        %v520 = vld [vmem:[%s510 + $0x10] sm:$0xf]
        %v521 = vld [vmem:[%s510 + $0x14] sm:$0xf]
        %v522 = vld [vmem:[%s510 + $0x18] sm:$0xf]
        %v523 = vld [vmem:[%s510 + $0x1c] sm:$0xf]
        %v524 = vld [vmem:[#allocation2] sm:$0xf]
        %v525 = vld [vmem:[#allocation2 + $0x4] sm:$0x1]
        %v526 = vld [vmem:[%s2] sm:$0x1]
        %v528 = vlaneseq
        %v529 = vshrl.u32 %v528, 7
        %v530 = vsub.s32 0, %v529
        %v531 = vrot.slane %v526, %v530
        %v541 = vunpack.c.l.b16 %v516
        %v542 = vunpack.c.l.b16 %v517
        %v543 = vunpack.c.l.b16 %v518
        %v544 = vunpack.c.l.b16 %v519
        %v545 = vunpack.c.l.b16 %v520
        %v546 = vunpack.c.l.b16 %v521
        %v547 = vunpack.c.l.b16 %v522
        %v548 = vunpack.c.l.b16 %v523
        %v549 = vpack.c.b16 %v542, %v541
        %v550 = vpack.c.b16 %v544, %v543
        %v551 = vpack.c.b16 %v546, %v545
        %v552 = vpack.c.b16 %v548, %v547
        %v555 = vunpack.c.l.b16 %v524
        %v556 = vunpack.c.l.b16 %v525
        %v557 = vpack.c.b16 %v556, %v555
        %vm558 = vcmask 72704
        %v560 = vsel %vm558, %v549, 0
        %v563 = vsel %vm558, %v550, 0
        %v566 = vsel %vm558, %v551, 0
        %v569 = vsel %vm558, %v552, 0
        %vm571 = vcmask 1043456
        %vm572 = vcmask 1044480
        %v573 = vsel %vm571, 4294967295, 65535
        %v574 = vsel %vm572, %v573, 0
        %v576 = vand.u32 %v557, %v574
        %578 = vmatprep.subr.bf16.mxu0 0
        %579 = vmatpush1.bf16.msra.mxu0 %v576
        %580 = vmatprep.subr.bf16.mxu0 0
        %581 = vmatpush1.bf16.msra.mxu0 0
        %582 = vmatprep.subr.bf16.mxu0 0
        %583 = vmatpush1.bf16.msra.mxu0 0
        %584 = vmatprep.subr.bf16.mxu0 0
        %585 = vmatpush1.bf16.msra.mxu0 0
        %586 = vmatprep.subr.bf16.mxu0 0
        %587 = vmatpush1.bf16.msra.mxu0 0
        %588 = vmatprep.subr.bf16.mxu0 0
        %589 = vmatpush1.bf16.msra.mxu0 0
        %590 = vmatprep.subr.bf16.mxu0 0
        %591 = vmatpush1.bf16.msra.mxu0 0
        %592 = vmatprep.subr.bf16.mxu0 0
        %593 = vmatpush1.bf16.msra.mxu0 0
        %594 = vmatprep.subr.bf16.mxu0 0
        %595 = vmatpush1.bf16.msra.mxu0 0
        %596 = vmatprep.subr.bf16.mxu0 0
        %597 = vmatpush1.bf16.msra.mxu0 0
        %598 = vmatprep.subr.bf16.mxu0 0
        %599 = vmatpush1.bf16.msra.mxu0 0
        %600 = vmatprep.subr.bf16.mxu0 0
        %601 = vmatpush1.bf16.msra.mxu0 0
        %602 = vmatprep.subr.bf16.mxu0 0
        %603 = vmatpush1.bf16.msra.mxu0 0
        %604 = vmatprep.subr.bf16.mxu0 0
        %605 = vmatpush1.bf16.msra.mxu0 0
        %606 = vmatprep.subr.bf16.mxu0 0
        %607 = vmatpush1.bf16.msra.mxu0 0
        %608 = vmatprep.subr.bf16.mxu0 0
        %609 = vmatpush1.bf16.msra.mxu0 0
        %610 = vmatprep.mubr.bf16.mxu0 0
        %611 = vmatmul.mubr.bf16.gmra.mrb[0].mxu0 %v560
        %v612 = vpop.f32.mrb[0].mxu0
        %v613 = vadd.f32 %v531, %v612
        %v614 = vpop.f32.mrb[0].mxu0
        %v615 = vpop.f32.mrb[0].mxu0
        %v616 = vadd.f32 %v531, %v615
        %v617 = vpop.f32.mrb[0].mxu0
        %618 = vmatprep.mubr.bf16.mxu0 0
        %619 = vmatmul.mubr.bf16.gmra.mrb[0].mxu0 %v563
        %v620 = vpop.f32.mrb[0].mxu0
        %v621 = vadd.f32 %v531, %v620
        %v622 = vpop.f32.mrb[0].mxu0
        %v623 = vpop.f32.mrb[0].mxu0
        %v624 = vadd.f32 %v531, %v623
        %v625 = vpop.f32.mrb[0].mxu0
        %626 = vmatprep.mubr.bf16.mxu0 0
        %627 = vmatmul.mubr.bf16.gmra.mrb[0].mxu0 %v566
        %v628 = vpop.f32.mrb[0].mxu0
        %v629 = vadd.f32 %v531, %v628
        %v630 = vpop.f32.mrb[0].mxu0
        %v631 = vpop.f32.mrb[0].mxu0
        %v632 = vadd.f32 %v531, %v631
        %v633 = vpop.f32.mrb[0].mxu0
        %634 = vmatprep.mubr.bf16.mxu0 0
        %635 = vmatmul.mubr.bf16.gmra.mrb[0].mxu0 %v569
        %v636 = vpop.f32.mrb[0].mxu0
        %v637 = vadd.f32 %v531, %v636
        %v638 = vpop.f32.mrb[0].mxu0
        %v639 = vpop.f32.mrb[0].mxu0
        %v640 = vadd.f32 %v531, %v639
        %v641 = vpop.f32.mrb[0].mxu0
        %642 = vdwg.mxu0
        %v643 = vmax.f32 %v613, 0.0
        %v644 = vmax.f32 %v616, 0.0
        %v645 = vmax.f32 %v621, 0.0
        %v646 = vmax.f32 %v624, 0.0
        %v647 = vmax.f32 %v629, 0.0
        %v648 = vmax.f32 %v632, 0.0
        %v649 = vmax.f32 %v637, 0.0
        %v650 = vmax.f32 %v640, 0.0
        %v651 = vpack.c.bf16 %v644, %v643
        %v652 = vpack.c.bf16 %v646, %v645
        %v653 = vpack.c.bf16 %v648, %v647
        %v654 = vpack.c.bf16 %v650, %v649
        %v655 = vld [vmem:[%s3] sm:$0xf]
        %v656 = vld [vmem:[%s3 + $0x4] sm:$0xf]
        %v657 = vld [vmem:[%s3 + $0x8] sm:$0xf]
        %v658 = vld [vmem:[%s3 + $0xc] sm:$0xf]
        %v659 = vld [vmem:[%s3 + $0x10] sm:$0xf]
        %v660 = vld [vmem:[%s3 + $0x14] sm:$0xf]
        %v661 = vld [vmem:[%s3 + $0x18] sm:$0xf]
        %v662 = vld [vmem:[%s3 + $0x1c] sm:$0xf]
        %v663 = vld [vmem:[%s4] sm:$0x1]
        %v665 = vlaneseq
        %v666 = vshrl.u32 %v665, 7
        %v667 = vsub.s32 0, %v666
        %v668 = vrot.slane %v663, %v667
        %v678 = vunpack.c.l.b16 %v655
        %v679 = vunpack.c.l.b16 %v656
        %v680 = vunpack.c.l.b16 %v657
        %v681 = vunpack.c.l.b16 %v658
        %v682 = vunpack.c.l.b16 %v659
        %v683 = vunpack.c.l.b16 %v660
        %v684 = vunpack.c.l.b16 %v661
        %v685 = vunpack.c.l.b16 %v662
        %v686 = vpack.c.b16 %v679, %v678
        %v687 = vpack.c.b16 %v681, %v680
        %v688 = vpack.c.b16 %v683, %v682
        %v689 = vpack.c.b16 %v685, %v684
        %vm694 = vcmask 523264
        %v696 = vsel %vm694, %v651, 0
        %v699 = vsel %vm694, %v652, 0
        %v702 = vsel %vm694, %v653, 0
        %v705 = vsel %vm694, %v654, 0
        %707 = vmatprep.subr.bf16.mxu0 0
        %708 = vmatpush1.bf16.msra.mxu0 %v686
        %709 = vmatprep.subr.bf16.mxu0 0
        %710 = vmatpush1.bf16.msra.mxu0 %v687
        %711 = vmatprep.subr.bf16.mxu0 0
        %712 = vmatpush1.bf16.msra.mxu0 %v688
        %713 = vmatprep.subr.bf16.mxu0 0
        %714 = vmatpush1.bf16.msra.mxu0 %v689
        %715 = vmatprep.subr.bf16.mxu0 0
        %716 = vmatpush1.bf16.msra.mxu0 0
        %717 = vmatprep.subr.bf16.mxu0 0
        %718 = vmatpush1.bf16.msra.mxu0 0
        %719 = vmatprep.subr.bf16.mxu0 0
        %720 = vmatpush1.bf16.msra.mxu0 0
        %721 = vmatprep.subr.bf16.mxu0 0
        %722 = vmatpush1.bf16.msra.mxu0 0
        %723 = vmatprep.subr.bf16.mxu0 0
        %724 = vmatpush1.bf16.msra.mxu0 0
        %725 = vmatprep.subr.bf16.mxu0 0
        %726 = vmatpush1.bf16.msra.mxu0 0
        %727 = vmatprep.subr.bf16.mxu0 0
        %728 = vmatpush1.bf16.msra.mxu0 0
        %729 = vmatprep.subr.bf16.mxu0 0
        %730 = vmatpush1.bf16.msra.mxu0 0
        %731 = vmatprep.subr.bf16.mxu0 0
        %732 = vmatpush1.bf16.msra.mxu0 0
        %733 = vmatprep.subr.bf16.mxu0 0
        %734 = vmatpush1.bf16.msra.mxu0 0
        %735 = vmatprep.subr.bf16.mxu0 0
        %736 = vmatpush1.bf16.msra.mxu0 0
        %737 = vmatprep.subr.bf16.mxu0 0
        %738 = vmatpush1.bf16.msra.mxu0 0
        %739 = vmatprep.mubr.bf16.mxu0 0
        %740 = vmatmul.mubr.bf16.gmra.mrb[0].mxu0 %v696
        %v741 = vpop.f32.mrb[0].mxu0
        %v742 = vadd.f32 %v668, %v741
        %v743 = vpop.f32.mrb[0].mxu0
        %v744 = vpop.f32.mrb[0].mxu0
        %v745 = vadd.f32 %v668, %v744
        %v746 = vpop.f32.mrb[0].mxu0
        %747 = vmatprep.mubr.bf16.mxu0 0
        %748 = vmatmul.mubr.bf16.gmra.mrb[0].mxu0 %v699
        %v749 = vpop.f32.mrb[0].mxu0
        %v750 = vadd.f32 %v668, %v749
        %v751 = vpop.f32.mrb[0].mxu0
        %v752 = vpop.f32.mrb[0].mxu0
        %v753 = vadd.f32 %v668, %v752
        %v754 = vpop.f32.mrb[0].mxu0
        %755 = vmatprep.mubr.bf16.mxu0 0
        %756 = vmatmul.mubr.bf16.gmra.mrb[0].mxu0 %v702
        %v757 = vpop.f32.mrb[0].mxu0
        %v758 = vadd.f32 %v668, %v757
        %v759 = vpop.f32.mrb[0].mxu0
        %v760 = vpop.f32.mrb[0].mxu0
        %v761 = vadd.f32 %v668, %v760
        %v762 = vpop.f32.mrb[0].mxu0
        %763 = vmatprep.mubr.bf16.mxu0 0
        %764 = vmatmul.mubr.bf16.gmra.mrb[0].mxu0 %v705
        %v765 = vpop.f32.mrb[0].mxu0
        %v766 = vadd.f32 %v668, %v765
        %v767 = vpop.f32.mrb[0].mxu0
        %v768 = vpop.f32.mrb[0].mxu0
        %v769 = vadd.f32 %v668, %v768
        %v770 = vpop.f32.mrb[0].mxu0
        %771 = vdwg.mxu0
        %v772 = vmax.f32 %v742, 0.0
        %v773 = vmax.f32 %v745, 0.0
        %v774 = vmax.f32 %v750, 0.0
        %v775 = vmax.f32 %v753, 0.0
        %v776 = vmax.f32 %v758, 0.0
        %v777 = vmax.f32 %v761, 0.0
        %v778 = vmax.f32 %v766, 0.0
        %v779 = vmax.f32 %v769, 0.0
        %v780 = vpack.c.bf16 %v773, %v772
        %v781 = vpack.c.bf16 %v775, %v774
        %v782 = vpack.c.bf16 %v777, %v776
        %v783 = vpack.c.bf16 %v779, %v778
        %v784 = vld [vmem:[%s5] sm:$0xf]
        %v785 = vld [vmem:[%s5 + $0x4] sm:$0xf]
        %v786 = vld [vmem:[%s5 + $0x8] sm:$0xf]
        %v787 = vld [vmem:[%s5 + $0xc] sm:$0xf]
        %v788 = vld [vmem:[%s5 + $0x10] sm:$0xf]
        %v789 = vld [vmem:[%s5 + $0x14] sm:$0xf]
        %v790 = vld [vmem:[%s5 + $0x18] sm:$0xf]
        %v791 = vld [vmem:[%s5 + $0x1c] sm:$0xf]
        %v792 = vld [vmem:[%s6] sm:$0x1]
        %v794 = vlaneseq
        %v795 = vshrl.u32 %v794, 7
        %v796 = vsub.s32 0, %v795
        %v797 = vrot.slane %v792, %v796
        %v807 = vunpack.c.l.b16 %v784
        %v808 = vunpack.c.l.b16 %v785
        %v809 = vunpack.c.l.b16 %v786
        %v810 = vunpack.c.l.b16 %v787
        %v811 = vunpack.c.l.b16 %v788
        %v812 = vunpack.c.l.b16 %v789
        %v813 = vunpack.c.l.b16 %v790
        %v814 = vunpack.c.l.b16 %v791
        %v815 = vpack.c.b16 %v808, %v807
        %v816 = vpack.c.b16 %v810, %v809
        %v817 = vpack.c.b16 %v812, %v811
        %v818 = vpack.c.b16 %v814, %v813
        %v824 = vsel %vm694, %v780, 0
        %v827 = vsel %vm694, %v781, 0
        %v830 = vsel %vm694, %v782, 0
        %v833 = vsel %vm694, %v783, 0
        %835 = vmatprep.subr.bf16.mxu0 0
        %836 = vmatpush1.bf16.msra.mxu0 %v815
        %837 = vmatprep.subr.bf16.mxu0 0
        %838 = vmatpush1.bf16.msra.mxu0 %v816
        %839 = vmatprep.subr.bf16.mxu0 0
        %840 = vmatpush1.bf16.msra.mxu0 %v817
        %841 = vmatprep.subr.bf16.mxu0 0
        %842 = vmatpush1.bf16.msra.mxu0 %v818
        %843 = vmatprep.subr.bf16.mxu0 0
        %844 = vmatpush1.bf16.msra.mxu0 0
        %845 = vmatprep.subr.bf16.mxu0 0
        %846 = vmatpush1.bf16.msra.mxu0 0
        %847 = vmatprep.subr.bf16.mxu0 0
        %848 = vmatpush1.bf16.msra.mxu0 0
        %849 = vmatprep.subr.bf16.mxu0 0
        %850 = vmatpush1.bf16.msra.mxu0 0
        %851 = vmatprep.subr.bf16.mxu0 0
        %852 = vmatpush1.bf16.msra.mxu0 0
        %853 = vmatprep.subr.bf16.mxu0 0
        %854 = vmatpush1.bf16.msra.mxu0 0
        %855 = vmatprep.subr.bf16.mxu0 0
        %856 = vmatpush1.bf16.msra.mxu0 0
        %857 = vmatprep.subr.bf16.mxu0 0
        %858 = vmatpush1.bf16.msra.mxu0 0
        %859 = vmatprep.subr.bf16.mxu0 0
        %860 = vmatpush1.bf16.msra.mxu0 0
        %861 = vmatprep.subr.bf16.mxu0 0
        %862 = vmatpush1.bf16.msra.mxu0 0
        %863 = vmatprep.subr.bf16.mxu0 0
        %864 = vmatpush1.bf16.msra.mxu0 0
        %865 = vmatprep.subr.bf16.mxu0 0
        %866 = vmatpush1.bf16.msra.mxu0 0
        %867 = vmatprep.mubr.bf16.mxu0 0
        %868 = vmatmul.mubr.bf16.gmra.mrb[0].mxu0 %v824
        %v869 = vpop.f32.mrb[0].mxu0
        %v870 = vadd.f32 %v797, %v869
        %v871 = vpop.f32.mrb[0].mxu0
        %v872 = vpop.f32.mrb[0].mxu0
        %v873 = vadd.f32 %v797, %v872
        %v874 = vpop.f32.mrb[0].mxu0
        %875 = vmatprep.mubr.bf16.mxu0 0
        %876 = vmatmul.mubr.bf16.gmra.mrb[0].mxu0 %v827
        %v877 = vpop.f32.mrb[0].mxu0
        %v878 = vadd.f32 %v797, %v877
        %v879 = vpop.f32.mrb[0].mxu0
        %v880 = vpop.f32.mrb[0].mxu0
        %v881 = vadd.f32 %v797, %v880
        %v882 = vpop.f32.mrb[0].mxu0
        %883 = vmatprep.mubr.bf16.mxu0 0
        %884 = vmatmul.mubr.bf16.gmra.mrb[0].mxu0 %v830
        %v885 = vpop.f32.mrb[0].mxu0
        %v886 = vadd.f32 %v797, %v885
        %v887 = vpop.f32.mrb[0].mxu0
        %v888 = vpop.f32.mrb[0].mxu0
        %v889 = vadd.f32 %v797, %v888
        %v890 = vpop.f32.mrb[0].mxu0
        %891 = vmatprep.mubr.bf16.mxu0 0
        %892 = vmatmul.mubr.bf16.gmra.mrb[0].mxu0 %v833
        %v893 = vpop.f32.mrb[0].mxu0
        %v894 = vadd.f32 %v797, %v893
        %v895 = vpop.f32.mrb[0].mxu0
        %v896 = vpop.f32.mrb[0].mxu0
        %v897 = vadd.f32 %v797, %v896
        %v898 = vpop.f32.mrb[0].mxu0
        %899 = vdwg.mxu0
        %v900 = vmax.f32 %v870, 0.0
        %v901 = vmax.f32 %v873, 0.0
        %v902 = vmax.f32 %v878, 0.0
        %v903 = vmax.f32 %v881, 0.0
        %v904 = vmax.f32 %v886, 0.0
        %v905 = vmax.f32 %v889, 0.0
        %v906 = vmax.f32 %v894, 0.0
        %v907 = vmax.f32 %v897, 0.0
        %v908 = vpack.c.bf16 %v901, %v900
        %v909 = vpack.c.bf16 %v903, %v902
        %v910 = vpack.c.bf16 %v905, %v904
        %v911 = vpack.c.bf16 %v907, %v906
        %v912 = vld [vmem:[%s7] sm:$0xf]
        %v913 = vld [vmem:[%s7 + $0x4] sm:$0xf]
        %v914 = vld [vmem:[%s7 + $0x8] sm:$0xf]
        %v915 = vld [vmem:[%s7 + $0xc] sm:$0xf]
        %v916 = vld [vmem:[%s7 + $0x10] sm:$0xf]
        %v917 = vld [vmem:[%s7 + $0x14] sm:$0xf]
        %v918 = vld [vmem:[%s7 + $0x18] sm:$0xf]
        %v919 = vld [vmem:[%s7 + $0x1c] sm:$0xf]
        %v920 = vld [vmem:[#allocation5] sm:$0x1]
        %v922 = vlaneseq
        %v923 = vshrl.u32 %v922, 7
        %v924 = vsub.s32 0, %v923
        %v925 = vrot.slane %v920, %v924
        %v935 = vunpack.c.l.b16 %v912
        %v936 = vunpack.c.l.b16 %v913
        %v937 = vunpack.c.l.b16 %v914
        %v938 = vunpack.c.l.b16 %v915
        %v939 = vunpack.c.l.b16 %v916
        %v940 = vunpack.c.l.b16 %v917
        %v941 = vunpack.c.l.b16 %v918
        %v942 = vunpack.c.l.b16 %v919
        %v943 = vpack.c.b16 %v936, %v935
        %v944 = vpack.c.b16 %v938, %v937
        %v945 = vpack.c.b16 %v940, %v939
        %v946 = vpack.c.b16 %v942, %v941
        %v952 = vsel %vm694, %v908, 0
        %v955 = vsel %vm694, %v909, 0
        %v958 = vsel %vm694, %v910, 0
        %v961 = vsel %vm694, %v911, 0
        %963 = vmatprep.subr.bf16.mxu0 0
        %964 = vmatpush1.bf16.msra.mxu0 %v943
        %965 = vmatprep.subr.bf16.mxu0 0
        %966 = vmatpush1.bf16.msra.mxu0 %v944
        %967 = vmatprep.subr.bf16.mxu0 0
        %968 = vmatpush1.bf16.msra.mxu0 %v945
        %969 = vmatprep.subr.bf16.mxu0 0
        %970 = vmatpush1.bf16.msra.mxu0 %v946
        %971 = vmatprep.subr.bf16.mxu0 0
        %972 = vmatpush1.bf16.msra.mxu0 0
        %973 = vmatprep.subr.bf16.mxu0 0
        %974 = vmatpush1.bf16.msra.mxu0 0
        %975 = vmatprep.subr.bf16.mxu0 0
        %976 = vmatpush1.bf16.msra.mxu0 0
        %977 = vmatprep.subr.bf16.mxu0 0
        %978 = vmatpush1.bf16.msra.mxu0 0
        %979 = vmatprep.subr.bf16.mxu0 0
        %980 = vmatpush1.bf16.msra.mxu0 0
        %981 = vmatprep.subr.bf16.mxu0 0
        %982 = vmatpush1.bf16.msra.mxu0 0
        %983 = vmatprep.subr.bf16.mxu0 0
        %984 = vmatpush1.bf16.msra.mxu0 0
        %985 = vmatprep.subr.bf16.mxu0 0
        %986 = vmatpush1.bf16.msra.mxu0 0
        %987 = vmatprep.subr.bf16.mxu0 0
        %988 = vmatpush1.bf16.msra.mxu0 0
        %989 = vmatprep.subr.bf16.mxu0 0
        %990 = vmatpush1.bf16.msra.mxu0 0
        %991 = vmatprep.subr.bf16.mxu0 0
        %992 = vmatpush1.bf16.msra.mxu0 0
        %993 = vmatprep.subr.bf16.mxu0 0
        %994 = vmatpush1.bf16.msra.mxu0 0
        %995 = vmatprep.mubr.bf16.mxu0 0
        %996 = vmatmul.mubr.bf16.gmra.mrb[0].mxu0 %v952
        %v997 = vpop.f32.mrb[0].mxu0
        %v998 = vadd.f32 %v925, %v997
        %v999 = vpop.f32.mrb[0].mxu0
        %v1000 = vpop.f32.mrb[0].mxu0
        %v1001 = vadd.f32 %v925, %v1000
        %v1002 = vpop.f32.mrb[0].mxu0
        %1003 = vmatprep.mubr.bf16.mxu0 0
        %1004 = vmatmul.mubr.bf16.gmra.mrb[0].mxu0 %v955
        %v1005 = vpop.f32.mrb[0].mxu0
        %v1006 = vadd.f32 %v925, %v1005
        %v1007 = vpop.f32.mrb[0].mxu0
        %v1008 = vpop.f32.mrb[0].mxu0
        %v1009 = vadd.f32 %v925, %v1008
        %v1010 = vpop.f32.mrb[0].mxu0
        %1011 = vmatprep.mubr.bf16.mxu0 0
        %1012 = vmatmul.mubr.bf16.gmra.mrb[0].mxu0 %v958
        %v1013 = vpop.f32.mrb[0].mxu0
        %v1014 = vadd.f32 %v925, %v1013
        %v1015 = vpop.f32.mrb[0].mxu0
        %v1016 = vpop.f32.mrb[0].mxu0
        %v1017 = vadd.f32 %v925, %v1016
        %v1018 = vpop.f32.mrb[0].mxu0
        %1019 = vmatprep.mubr.bf16.mxu0 0
        %1020 = vmatmul.mubr.bf16.gmra.mrb[0].mxu0 %v961
        %v1021 = vpop.f32.mrb[0].mxu0
        %v1022 = vadd.f32 %v925, %v1021
        %v1023 = vpop.f32.mrb[0].mxu0
        %v1024 = vpop.f32.mrb[0].mxu0
        %v1025 = vadd.f32 %v925, %v1024
        %v1026 = vpop.f32.mrb[0].mxu0
        %1027 = vdwg.mxu0
        %v1028 = vmax.f32 %v998, 0.0
        %v1029 = vmax.f32 %v1001, 0.0
        %v1030 = vmax.f32 %v1006, 0.0
        %v1031 = vmax.f32 %v1009, 0.0
        %v1032 = vmax.f32 %v1014, 0.0
        %v1033 = vmax.f32 %v1017, 0.0
        %v1034 = vmax.f32 %v1022, 0.0
        %v1035 = vmax.f32 %v1025, 0.0
        %v1036 = vpack.c.bf16 %v1029, %v1028
        %v1037 = vpack.c.bf16 %v1031, %v1030
        %v1038 = vpack.c.bf16 %v1033, %v1032
        %v1039 = vpack.c.bf16 %v1035, %v1034
        %v1040 = vld [vmem:[#allocation7] sm:$0xff]
        %v1041 = vld [vmem:[#allocation7 + $0x8] sm:$0xff]
        %v1042 = vld [vmem:[#allocation7 + $0x10] sm:$0xff]
        %v1043 = vld [vmem:[#allocation7 + $0x18] sm:$0xff]
        %v1044 = vld [vmem:[#allocation7 + $0x20] sm:$0xff]
        %v1045 = vld [vmem:[#allocation7 + $0x28] sm:$0xff]
        %v1046 = vld [vmem:[#allocation7 + $0x30] sm:$0xff]
        %v1047 = vld [vmem:[#allocation7 + $0x38] sm:$0xff]
        %v1048 = vld [vmem:[#allocation7 + $0x40] sm:$0xff]
        %v1049 = vld [vmem:[#allocation7 + $0x48] sm:$0xff]
        %v1050 = vld [vmem:[#allocation7 + $0x50] sm:$0xff]
        %v1051 = vld [vmem:[#allocation7 + $0x58] sm:$0xff]
        %v1052 = vld [vmem:[#allocation7 + $0x60] sm:$0xff]
        %v1053 = vld [vmem:[#allocation7 + $0x68] sm:$0xff]
        %v1054 = vld [vmem:[#allocation7 + $0x70] sm:$0xff]
        %v1055 = vld [vmem:[#allocation7 + $0x78] sm:$0xff]
        %v1056 = vld [vmem:[#allocation7 + $0x80] sm:$0xff]
        %v1057 = vld [vmem:[#allocation7 + $0x88] sm:$0xff]
        %v1058 = vld [vmem:[#allocation7 + $0x90] sm:$0xff]
        %v1059 = vld [vmem:[#allocation7 + $0x98] sm:$0xff]
        %v1060 = vld [vmem:[#allocation7 + $0xa0] sm:$0xff]
        %v1061 = vld [vmem:[#allocation7 + $0xa8] sm:$0xff]
        %v1062 = vld [vmem:[#allocation7 + $0xb0] sm:$0xff]
        %v1063 = vld [vmem:[#allocation7 + $0xb8] sm:$0xff]
        %v1064 = vld [vmem:[#allocation7 + $0xc0] sm:$0xff]
        %v1065 = vld [vmem:[#allocation7 + $0xc8] sm:$0xff]
        %v1066 = vld [vmem:[#allocation7 + $0xd0] sm:$0xff]
        %v1067 = vld [vmem:[#allocation7 + $0xd8] sm:$0xff]
        %v1068 = vld [vmem:[#allocation7 + $0xe0] sm:$0xff]
        %v1069 = vld [vmem:[#allocation7 + $0xe8] sm:$0xff]
        %v1070 = vld [vmem:[#allocation7 + $0xf0] sm:$0xff]
        %v1071 = vld [vmem:[#allocation7 + $0xf8] sm:$0xff]
        %v1072 = vld [vmem:[#allocation7 + $0x100] sm:$0xff]
        %v1073 = vld [vmem:[#allocation7 + $0x108] sm:$0xff]
        %v1074 = vld [vmem:[#allocation7 + $0x110] sm:$0xff]
        %v1075 = vld [vmem:[#allocation7 + $0x118] sm:$0xff]
        %v1076 = vld [vmem:[#allocation7 + $0x120] sm:$0xff]
        %v1077 = vld [vmem:[#allocation7 + $0x128] sm:$0xff]
        %v1078 = vld [vmem:[#allocation7 + $0x130] sm:$0xff]
        %v1079 = vld [vmem:[#allocation7 + $0x138] sm:$0xff]
        %v1080 = vld [vmem:[#allocation7 + $0x140] sm:$0xff]
        %v1081 = vld [vmem:[#allocation7 + $0x148] sm:$0xff]
        %v1082 = vld [vmem:[#allocation7 + $0x150] sm:$0xff]
        %v1083 = vld [vmem:[#allocation7 + $0x158] sm:$0xff]
        %v1084 = vld [vmem:[#allocation7 + $0x160] sm:$0xff]
        %v1085 = vld [vmem:[#allocation7 + $0x168] sm:$0xff]
        %v1086 = vld [vmem:[#allocation7 + $0x170] sm:$0xff]
        %v1087 = vld [vmem:[#allocation7 + $0x178] sm:$0xff]
        %v1088 = vld [vmem:[#allocation7 + $0x180] sm:$0xff]
        %v1089 = vld [vmem:[#allocation7 + $0x188] sm:$0xff]
        %v1090 = vld [vmem:[#allocation7 + $0x190] sm:$0xff]
        %v1091 = vld [vmem:[#allocation7 + $0x198] sm:$0xff]
        %v1092 = vld [vmem:[#allocation7 + $0x1a0] sm:$0xff]
        %v1093 = vld [vmem:[#allocation7 + $0x1a8] sm:$0xff]
        %v1094 = vld [vmem:[#allocation7 + $0x1b0] sm:$0xff]
        %v1095 = vld [vmem:[#allocation7 + $0x1b8] sm:$0xff]
        %v1096 = vld [vmem:[#allocation7 + $0x1c0] sm:$0xff]
        %v1097 = vld [vmem:[#allocation7 + $0x1c8] sm:$0xff]
        %v1098 = vld [vmem:[#allocation7 + $0x1d0] sm:$0xff]
        %v1099 = vld [vmem:[#allocation7 + $0x1d8] sm:$0xff]
        %v1100 = vld [vmem:[#allocation7 + $0x1e0] sm:$0xff]
        %v1101 = vld [vmem:[#allocation7 + $0x1e8] sm:$0xff]
        %v1102 = vld [vmem:[#allocation7 + $0x1f0] sm:$0xff]
        %v1103 = vld [vmem:[#allocation7 + $0x1f8] sm:$0xff]
        %v1104 = vld [vmem:[%s10] sm:$0xff]
        %v1106 = vlaneseq
        %v1107 = vshrl.u32 %v1106, 7
        %v1108 = vsub.s32 0, %v1107
        %v1109 = vrot.slane %v1104, %v1108
        %v1110 = vlaneseq
        %v1111 = vshrl.u32 %v1110, 7
        %v1112 = vsub.s32 1, %v1111
        %v1113 = vrot.slane %v1104, %v1112
        %v1114 = vlaneseq
        %v1115 = vshrl.u32 %v1114, 7
        %v1116 = vsub.s32 2, %v1115
        %v1117 = vrot.slane %v1104, %v1116
        %v1118 = vlaneseq
        %v1119 = vshrl.u32 %v1118, 7
        %v1120 = vsub.s32 3, %v1119
        %v1121 = vrot.slane %v1104, %v1120
        %v1122 = vlaneseq
        %v1123 = vshrl.u32 %v1122, 7
        %v1124 = vsub.s32 4, %v1123
        %v1125 = vrot.slane %v1104, %v1124
        %v1126 = vlaneseq
        %v1127 = vshrl.u32 %v1126, 7
        %v1128 = vsub.s32 5, %v1127
        %v1129 = vrot.slane %v1104, %v1128
        %v1130 = vlaneseq
        %v1131 = vshrl.u32 %v1130, 7
        %v1132 = vsub.s32 6, %v1131
        %v1133 = vrot.slane %v1104, %v1132
        %v1134 = vlaneseq
        %v1135 = vshrl.u32 %v1134, 7
        %v1136 = vsub.s32 7, %v1135
        %v1137 = vrot.slane %v1104, %v1136
        %v1210 = vunpack.c.l.b16 %v1040
        %v1211 = vunpack.c.h.b16 %v1040
        %v1212 = vunpack.c.l.b16 %v1041
        %v1213 = vunpack.c.h.b16 %v1041
        %v1214 = vunpack.c.l.b16 %v1042
        %v1215 = vunpack.c.h.b16 %v1042
        %v1216 = vunpack.c.l.b16 %v1043
        %v1217 = vunpack.c.h.b16 %v1043
        %v1218 = vunpack.c.l.b16 %v1044
        %v1219 = vunpack.c.h.b16 %v1044
        %v1220 = vunpack.c.l.b16 %v1045
        %v1221 = vunpack.c.h.b16 %v1045
        %v1222 = vunpack.c.l.b16 %v1046
        %v1223 = vunpack.c.h.b16 %v1046
        %v1224 = vunpack.c.l.b16 %v1047
        %v1225 = vunpack.c.h.b16 %v1047
        %v1226 = vunpack.c.l.b16 %v1048
        %v1227 = vunpack.c.h.b16 %v1048
        %v1228 = vunpack.c.l.b16 %v1049
        %v1229 = vunpack.c.h.b16 %v1049
        %v1230 = vunpack.c.l.b16 %v1050
        %v1231 = vunpack.c.h.b16 %v1050
        %v1232 = vunpack.c.l.b16 %v1051
        %v1233 = vunpack.c.h.b16 %v1051
        %v1234 = vunpack.c.l.b16 %v1052
        %v1235 = vunpack.c.h.b16 %v1052
        %v1236 = vunpack.c.l.b16 %v1053
        %v1237 = vunpack.c.h.b16 %v1053
        %v1238 = vunpack.c.l.b16 %v1054
        %v1239 = vunpack.c.h.b16 %v1054
        %v1240 = vunpack.c.l.b16 %v1055
        %v1241 = vunpack.c.h.b16 %v1055
        %v1242 = vunpack.c.l.b16 %v1056
        %v1243 = vunpack.c.h.b16 %v1056
        %v1244 = vunpack.c.l.b16 %v1057
        %v1245 = vunpack.c.h.b16 %v1057
        %v1246 = vunpack.c.l.b16 %v1058
        %v1247 = vunpack.c.h.b16 %v1058
        %v1248 = vunpack.c.l.b16 %v1059
        %v1249 = vunpack.c.h.b16 %v1059
        %v1250 = vunpack.c.l.b16 %v1060
        %v1251 = vunpack.c.h.b16 %v1060
        %v1252 = vunpack.c.l.b16 %v1061
        %v1253 = vunpack.c.h.b16 %v1061
        %v1254 = vunpack.c.l.b16 %v1062
        %v1255 = vunpack.c.h.b16 %v1062
        %v1256 = vunpack.c.l.b16 %v1063
        %v1257 = vunpack.c.h.b16 %v1063
        %v1258 = vunpack.c.l.b16 %v1064
        %v1259 = vunpack.c.h.b16 %v1064
        %v1260 = vunpack.c.l.b16 %v1065
        %v1261 = vunpack.c.h.b16 %v1065
        %v1262 = vunpack.c.l.b16 %v1066
        %v1263 = vunpack.c.h.b16 %v1066
        %v1264 = vunpack.c.l.b16 %v1067
        %v1265 = vunpack.c.h.b16 %v1067
        %v1266 = vunpack.c.l.b16 %v1068
        %v1267 = vunpack.c.h.b16 %v1068
        %v1268 = vunpack.c.l.b16 %v1069
        %v1269 = vunpack.c.h.b16 %v1069
        %v1270 = vunpack.c.l.b16 %v1070
        %v1271 = vunpack.c.h.b16 %v1070
        %v1272 = vunpack.c.l.b16 %v1071
        %v1273 = vunpack.c.h.b16 %v1071
        %v1274 = vunpack.c.l.b16 %v1072
        %v1275 = vunpack.c.h.b16 %v1072
        %v1276 = vunpack.c.l.b16 %v1073
        %v1277 = vunpack.c.h.b16 %v1073
        %v1278 = vunpack.c.l.b16 %v1074
        %v1279 = vunpack.c.h.b16 %v1074
        %v1280 = vunpack.c.l.b16 %v1075
        %v1281 = vunpack.c.h.b16 %v1075
        %v1282 = vunpack.c.l.b16 %v1076
        %v1283 = vunpack.c.h.b16 %v1076
        %v1284 = vunpack.c.l.b16 %v1077
        %v1285 = vunpack.c.h.b16 %v1077
        %v1286 = vunpack.c.l.b16 %v1078
        %v1287 = vunpack.c.h.b16 %v1078
        %v1288 = vunpack.c.l.b16 %v1079
        %v1289 = vunpack.c.h.b16 %v1079
        %v1290 = vunpack.c.l.b16 %v1080
        %v1291 = vunpack.c.h.b16 %v1080
        %v1292 = vunpack.c.l.b16 %v1081
        %v1293 = vunpack.c.h.b16 %v1081
        %v1294 = vunpack.c.l.b16 %v1082
        %v1295 = vunpack.c.h.b16 %v1082
        %v1296 = vunpack.c.l.b16 %v1083
        %v1297 = vunpack.c.h.b16 %v1083
        %v1298 = vunpack.c.l.b16 %v1084
        %v1299 = vunpack.c.h.b16 %v1084
        %v1300 = vunpack.c.l.b16 %v1085
        %v1301 = vunpack.c.h.b16 %v1085
        %v1302 = vunpack.c.l.b16 %v1086
        %v1303 = vunpack.c.h.b16 %v1086
        %v1304 = vunpack.c.l.b16 %v1087
        %v1305 = vunpack.c.h.b16 %v1087
        %v1306 = vunpack.c.l.b16 %v1088
        %v1307 = vunpack.c.h.b16 %v1088
        %v1308 = vunpack.c.l.b16 %v1089
        %v1309 = vunpack.c.h.b16 %v1089
        %v1310 = vunpack.c.l.b16 %v1090
        %v1311 = vunpack.c.h.b16 %v1090
        %v1312 = vunpack.c.l.b16 %v1091
        %v1313 = vunpack.c.h.b16 %v1091
        %v1314 = vunpack.c.l.b16 %v1092
        %v1315 = vunpack.c.h.b16 %v1092
        %v1316 = vunpack.c.l.b16 %v1093
        %v1317 = vunpack.c.h.b16 %v1093
        %v1318 = vunpack.c.l.b16 %v1094
        %v1319 = vunpack.c.h.b16 %v1094
        %v1320 = vunpack.c.l.b16 %v1095
        %v1321 = vunpack.c.h.b16 %v1095
        %v1322 = vunpack.c.l.b16 %v1096
        %v1323 = vunpack.c.h.b16 %v1096
        %v1324 = vunpack.c.l.b16 %v1097
        %v1325 = vunpack.c.h.b16 %v1097
        %v1326 = vunpack.c.l.b16 %v1098
        %v1327 = vunpack.c.h.b16 %v1098
        %v1328 = vunpack.c.l.b16 %v1099
        %v1329 = vunpack.c.h.b16 %v1099
        %v1330 = vunpack.c.l.b16 %v1100
        %v1331 = vunpack.c.h.b16 %v1100
        %v1332 = vunpack.c.l.b16 %v1101
        %v1333 = vunpack.c.h.b16 %v1101
        %v1334 = vunpack.c.l.b16 %v1102
        %v1335 = vunpack.c.h.b16 %v1102
        %v1336 = vunpack.c.l.b16 %v1103
        %v1337 = vunpack.c.h.b16 %v1103
        %v1338 = vpack.c.b16 %v1218, %v1210
        %v1339 = vpack.c.b16 %v1219, %v1211
        %v1340 = vpack.c.b16 %v1220, %v1212
        %v1341 = vpack.c.b16 %v1221, %v1213
        %v1342 = vpack.c.b16 %v1222, %v1214
        %v1343 = vpack.c.b16 %v1223, %v1215
        %v1344 = vpack.c.b16 %v1224, %v1216
        %v1345 = vpack.c.b16 %v1225, %v1217
        %v1346 = vpack.c.b16 %v1234, %v1226
        %v1347 = vpack.c.b16 %v1235, %v1227
        %v1348 = vpack.c.b16 %v1236, %v1228
        %v1349 = vpack.c.b16 %v1237, %v1229
        %v1350 = vpack.c.b16 %v1238, %v1230
        %v1351 = vpack.c.b16 %v1239, %v1231
        %v1352 = vpack.c.b16 %v1240, %v1232
        %v1353 = vpack.c.b16 %v1241, %v1233
        %v1354 = vpack.c.b16 %v1250, %v1242
        %v1355 = vpack.c.b16 %v1251, %v1243
        %v1356 = vpack.c.b16 %v1252, %v1244
        %v1357 = vpack.c.b16 %v1253, %v1245
        %v1358 = vpack.c.b16 %v1254, %v1246
        %v1359 = vpack.c.b16 %v1255, %v1247
        %v1360 = vpack.c.b16 %v1256, %v1248
        %v1361 = vpack.c.b16 %v1257, %v1249
        %v1362 = vpack.c.b16 %v1266, %v1258
        %v1363 = vpack.c.b16 %v1267, %v1259
        %v1364 = vpack.c.b16 %v1268, %v1260
        %v1365 = vpack.c.b16 %v1269, %v1261
        %v1366 = vpack.c.b16 %v1270, %v1262
        %v1367 = vpack.c.b16 %v1271, %v1263
        %v1368 = vpack.c.b16 %v1272, %v1264
        %v1369 = vpack.c.b16 %v1273, %v1265
        %v1370 = vpack.c.b16 %v1282, %v1274
        %v1371 = vpack.c.b16 %v1283, %v1275
        %v1372 = vpack.c.b16 %v1284, %v1276
        %v1373 = vpack.c.b16 %v1285, %v1277
        %v1374 = vpack.c.b16 %v1286, %v1278
        %v1375 = vpack.c.b16 %v1287, %v1279
        %v1376 = vpack.c.b16 %v1288, %v1280
        %v1377 = vpack.c.b16 %v1289, %v1281
        %v1378 = vpack.c.b16 %v1298, %v1290
        %v1379 = vpack.c.b16 %v1299, %v1291
        %v1380 = vpack.c.b16 %v1300, %v1292
        %v1381 = vpack.c.b16 %v1301, %v1293
        %v1382 = vpack.c.b16 %v1302, %v1294
        %v1383 = vpack.c.b16 %v1303, %v1295
        %v1384 = vpack.c.b16 %v1304, %v1296
        %v1385 = vpack.c.b16 %v1305, %v1297
        %v1386 = vpack.c.b16 %v1314, %v1306
        %v1387 = vpack.c.b16 %v1315, %v1307
        %v1388 = vpack.c.b16 %v1316, %v1308
        %v1389 = vpack.c.b16 %v1317, %v1309
        %v1390 = vpack.c.b16 %v1318, %v1310
        %v1391 = vpack.c.b16 %v1319, %v1311
        %v1392 = vpack.c.b16 %v1320, %v1312
        %v1393 = vpack.c.b16 %v1321, %v1313
        %v1394 = vpack.c.b16 %v1330, %v1322
        %v1395 = vpack.c.b16 %v1331, %v1323
        %v1396 = vpack.c.b16 %v1332, %v1324
        %v1397 = vpack.c.b16 %v1333, %v1325
        %v1398 = vpack.c.b16 %v1334, %v1326
        %v1399 = vpack.c.b16 %v1335, %v1327
        %v1400 = vpack.c.b16 %v1336, %v1328
        %v1401 = vpack.c.b16 %v1337, %v1329
        %1466 = vmatprep.subr.bf16.mxu0 %v1339
        %1467 = vmatpush1.bf16.msra.mxu0 %v1338
        %1468 = vmatprep.subr.bf16.mxu0 %v1347
        %1469 = vmatpush1.bf16.msra.mxu0 %v1346
        %1470 = vmatprep.subr.bf16.mxu0 %v1355
        %1471 = vmatpush1.bf16.msra.mxu0 %v1354
        %1472 = vmatprep.subr.bf16.mxu0 %v1363
        %1473 = vmatpush1.bf16.msra.mxu0 %v1362
        %1474 = vmatprep.subr.bf16.mxu0 %v1371
        %1475 = vmatpush1.bf16.msra.mxu0 %v1370
        %1476 = vmatprep.subr.bf16.mxu0 %v1379
        %1477 = vmatpush1.bf16.msra.mxu0 %v1378
        %1478 = vmatprep.subr.bf16.mxu0 %v1387
        %1479 = vmatpush1.bf16.msra.mxu0 %v1386
        %1480 = vmatprep.subr.bf16.mxu0 %v1395
        %1481 = vmatpush1.bf16.msra.mxu0 %v1394
        %1482 = vmatprep.subr.bf16.mxu0 0
        %1483 = vmatpush1.bf16.msra.mxu0 0
        %1484 = vmatprep.subr.bf16.mxu0 0
        %1485 = vmatpush1.bf16.msra.mxu0 0
        %1486 = vmatprep.subr.bf16.mxu0 0
        %1487 = vmatpush1.bf16.msra.mxu0 0
        %1488 = vmatprep.subr.bf16.mxu0 0
        %1489 = vmatpush1.bf16.msra.mxu0 0
        %1490 = vmatprep.subr.bf16.mxu0 0
        %1491 = vmatpush1.bf16.msra.mxu0 0
        %1492 = vmatprep.subr.bf16.mxu0 0
        %1493 = vmatpush1.bf16.msra.mxu0 0
        %1494 = vmatprep.subr.bf16.mxu0 0
        %1495 = vmatpush1.bf16.msra.mxu0 0
        %1496 = vmatprep.subr.bf16.mxu0 0
        %1497 = vmatpush1.bf16.msra.mxu0 0
        %1498 = vmatprep.mubr.bf16.mxu0 0
        %1499 = vmatmul.mubr.bf16.gmra.mrb[0].mxu0 %v1036
        %v1500 = vpop.f32.mrb[0].mxu0
        %v1501 = vadd.f32 %v1109, %v1500
        %v1502 = vpop.f32.mrb[0].mxu0
        %v1503 = vadd.f32 %v1113, %v1502
        %v1504 = vpop.f32.mrb[0].mxu0
        %v1505 = vadd.f32 %v1109, %v1504
        %v1506 = vpop.f32.mrb[0].mxu0
        %v1507 = vadd.f32 %v1113, %v1506
        %1508 = vmatprep.mubr.bf16.mxu0 0
        %1509 = vmatmul.mubr.bf16.gmra.mrb[0].mxu0 %v1037
        %v1510 = vpop.f32.mrb[0].mxu0
        %v1511 = vadd.f32 %v1109, %v1510
        %v1512 = vpop.f32.mrb[0].mxu0
        %v1513 = vadd.f32 %v1113, %v1512
        %v1514 = vpop.f32.mrb[0].mxu0
        %v1515 = vadd.f32 %v1109, %v1514
        %v1516 = vpop.f32.mrb[0].mxu0
        %v1517 = vadd.f32 %v1113, %v1516
        %1518 = vmatprep.mubr.bf16.mxu0 0
        %1519 = vmatmul.mubr.bf16.gmra.mrb[0].mxu0 %v1038
        %v1520 = vpop.f32.mrb[0].mxu0
        %v1521 = vadd.f32 %v1109, %v1520
        %v1522 = vpop.f32.mrb[0].mxu0
        %v1523 = vadd.f32 %v1113, %v1522
        %v1524 = vpop.f32.mrb[0].mxu0
        %v1525 = vadd.f32 %v1109, %v1524
        %v1526 = vpop.f32.mrb[0].mxu0
        %v1527 = vadd.f32 %v1113, %v1526
        %1528 = vmatprep.mubr.bf16.mxu0 0
        %1529 = vmatmul.mubr.bf16.gmra.mrb[0].mxu0 %v1039
        %v1530 = vpop.f32.mrb[0].mxu0
        %v1531 = vadd.f32 %v1109, %v1530
        %v1532 = vpop.f32.mrb[0].mxu0
        %v1533 = vadd.f32 %v1113, %v1532
        %v1534 = vpop.f32.mrb[0].mxu0
        %v1535 = vadd.f32 %v1109, %v1534
        %v1536 = vpop.f32.mrb[0].mxu0
        %v1537 = vadd.f32 %v1113, %v1536
        %1538 = vdwg.mxu0
        %1539 = vmatprep.subr.bf16.mxu0 %v1341
        %1540 = vmatpush1.bf16.msra.mxu0 %v1340
        %1541 = vmatprep.subr.bf16.mxu0 %v1349
        %1542 = vmatpush1.bf16.msra.mxu0 %v1348
        %1543 = vmatprep.subr.bf16.mxu0 %v1357
        %1544 = vmatpush1.bf16.msra.mxu0 %v1356
        %1545 = vmatprep.subr.bf16.mxu0 %v1365
        %1546 = vmatpush1.bf16.msra.mxu0 %v1364
        %1547 = vmatprep.subr.bf16.mxu0 %v1373
        %1548 = vmatpush1.bf16.msra.mxu0 %v1372
        %1549 = vmatprep.subr.bf16.mxu0 %v1381
        %1550 = vmatpush1.bf16.msra.mxu0 %v1380
        %1551 = vmatprep.subr.bf16.mxu0 %v1389
        %1552 = vmatpush1.bf16.msra.mxu0 %v1388
        %1553 = vmatprep.subr.bf16.mxu0 %v1397
        %1554 = vmatpush1.bf16.msra.mxu0 %v1396
        %1555 = vmatprep.subr.bf16.mxu0 0
        %1556 = vmatpush1.bf16.msra.mxu0 0
        %1557 = vmatprep.subr.bf16.mxu0 0
        %1558 = vmatpush1.bf16.msra.mxu0 0
        %1559 = vmatprep.subr.bf16.mxu0 0
        %1560 = vmatpush1.bf16.msra.mxu0 0
        %1561 = vmatprep.subr.bf16.mxu0 0
        %1562 = vmatpush1.bf16.msra.mxu0 0
        %1563 = vmatprep.subr.bf16.mxu0 0
        %1564 = vmatpush1.bf16.msra.mxu0 0
        %1565 = vmatprep.subr.bf16.mxu0 0
        %1566 = vmatpush1.bf16.msra.mxu0 0
        %1567 = vmatprep.subr.bf16.mxu0 0
        %1568 = vmatpush1.bf16.msra.mxu0 0
        %1569 = vmatprep.subr.bf16.mxu0 0
        %1570 = vmatpush1.bf16.msra.mxu0 0
        %1571 = vmatprep.mubr.bf16.mxu0 0
        %1572 = vmatmul.mubr.bf16.gmra.mrb[0].mxu0 %v1036
        %v1573 = vpop.f32.mrb[0].mxu0
        %v1574 = vadd.f32 %v1117, %v1573
        %v1575 = vpop.f32.mrb[0].mxu0
        %v1576 = vadd.f32 %v1121, %v1575
        %v1577 = vpop.f32.mrb[0].mxu0
        %v1578 = vadd.f32 %v1117, %v1577
        %v1579 = vpop.f32.mrb[0].mxu0
        %v1580 = vadd.f32 %v1121, %v1579
        %1581 = vmatprep.mubr.bf16.mxu0 0
        %1582 = vmatmul.mubr.bf16.gmra.mrb[0].mxu0 %v1037
        %v1583 = vpop.f32.mrb[0].mxu0
        %v1584 = vadd.f32 %v1117, %v1583
        %v1585 = vpop.f32.mrb[0].mxu0
        %v1586 = vadd.f32 %v1121, %v1585
        %v1587 = vpop.f32.mrb[0].mxu0
        %v1588 = vadd.f32 %v1117, %v1587
        %v1589 = vpop.f32.mrb[0].mxu0
        %v1590 = vadd.f32 %v1121, %v1589
        %1591 = vmatprep.mubr.bf16.mxu0 0
        %1592 = vmatmul.mubr.bf16.gmra.mrb[0].mxu0 %v1038
        %v1593 = vpop.f32.mrb[0].mxu0
        %v1594 = vadd.f32 %v1117, %v1593
        %v1595 = vpop.f32.mrb[0].mxu0
        %v1596 = vadd.f32 %v1121, %v1595
        %v1597 = vpop.f32.mrb[0].mxu0
        %v1598 = vadd.f32 %v1117, %v1597
        %v1599 = vpop.f32.mrb[0].mxu0
        %v1600 = vadd.f32 %v1121, %v1599
        %1601 = vmatprep.mubr.bf16.mxu0 0
        %1602 = vmatmul.mubr.bf16.gmra.mrb[0].mxu0 %v1039
        %v1603 = vpop.f32.mrb[0].mxu0
        %v1604 = vadd.f32 %v1117, %v1603
        %v1605 = vpop.f32.mrb[0].mxu0
        %v1606 = vadd.f32 %v1121, %v1605
        %v1607 = vpop.f32.mrb[0].mxu0
        %v1608 = vadd.f32 %v1117, %v1607
        %v1609 = vpop.f32.mrb[0].mxu0
        %v1610 = vadd.f32 %v1121, %v1609
        %1611 = vdwg.mxu0
        %1612 = vmatprep.subr.bf16.mxu0 %v1343
        %1613 = vmatpush1.bf16.msra.mxu0 %v1342
        %1614 = vmatprep.subr.bf16.mxu0 %v1351
        %1615 = vmatpush1.bf16.msra.mxu0 %v1350
        %1616 = vmatprep.subr.bf16.mxu0 %v1359
        %1617 = vmatpush1.bf16.msra.mxu0 %v1358
        %1618 = vmatprep.subr.bf16.mxu0 %v1367
        %1619 = vmatpush1.bf16.msra.mxu0 %v1366
        %1620 = vmatprep.subr.bf16.mxu0 %v1375
        %1621 = vmatpush1.bf16.msra.mxu0 %v1374
        %1622 = vmatprep.subr.bf16.mxu0 %v1383
        %1623 = vmatpush1.bf16.msra.mxu0 %v1382
        %1624 = vmatprep.subr.bf16.mxu0 %v1391
        %1625 = vmatpush1.bf16.msra.mxu0 %v1390
        %1626 = vmatprep.subr.bf16.mxu0 %v1399
        %1627 = vmatpush1.bf16.msra.mxu0 %v1398
        %1628 = vmatprep.subr.bf16.mxu0 0
        %1629 = vmatpush1.bf16.msra.mxu0 0
        %1630 = vmatprep.subr.bf16.mxu0 0
        %1631 = vmatpush1.bf16.msra.mxu0 0
        %1632 = vmatprep.subr.bf16.mxu0 0
        %1633 = vmatpush1.bf16.msra.mxu0 0
        %1634 = vmatprep.subr.bf16.mxu0 0
        %1635 = vmatpush1.bf16.msra.mxu0 0
        %1636 = vmatprep.subr.bf16.mxu0 0
        %1637 = vmatpush1.bf16.msra.mxu0 0
        %1638 = vmatprep.subr.bf16.mxu0 0
        %1639 = vmatpush1.bf16.msra.mxu0 0
        %1640 = vmatprep.subr.bf16.mxu0 0
        %1641 = vmatpush1.bf16.msra.mxu0 0
        %1642 = vmatprep.subr.bf16.mxu0 0
        %1643 = vmatpush1.bf16.msra.mxu0 0
        %1644 = vmatprep.mubr.bf16.mxu0 0
        %1645 = vmatmul.mubr.bf16.gmra.mrb[0].mxu0 %v1036
        %v1646 = vpop.f32.mrb[0].mxu0
        %v1647 = vadd.f32 %v1125, %v1646
        %v1648 = vpop.f32.mrb[0].mxu0
        %v1649 = vadd.f32 %v1129, %v1648
        %v1650 = vpop.f32.mrb[0].mxu0
        %v1651 = vadd.f32 %v1125, %v1650
        %v1652 = vpop.f32.mrb[0].mxu0
        %v1653 = vadd.f32 %v1129, %v1652
        %1654 = vmatprep.mubr.bf16.mxu0 0
        %1655 = vmatmul.mubr.bf16.gmra.mrb[0].mxu0 %v1037
        %v1656 = vpop.f32.mrb[0].mxu0
        %v1657 = vadd.f32 %v1125, %v1656
        %v1658 = vpop.f32.mrb[0].mxu0
        %v1659 = vadd.f32 %v1129, %v1658
        %v1660 = vpop.f32.mrb[0].mxu0
        %v1661 = vadd.f32 %v1125, %v1660
        %v1662 = vpop.f32.mrb[0].mxu0
        %v1663 = vadd.f32 %v1129, %v1662
        %1664 = vmatprep.mubr.bf16.mxu0 0
        %1665 = vmatmul.mubr.bf16.gmra.mrb[0].mxu0 %v1038
        %v1666 = vpop.f32.mrb[0].mxu0
        %v1667 = vadd.f32 %v1125, %v1666
        %v1668 = vpop.f32.mrb[0].mxu0
        %v1669 = vadd.f32 %v1129, %v1668
        %v1670 = vpop.f32.mrb[0].mxu0
        %v1671 = vadd.f32 %v1125, %v1670
        %v1672 = vpop.f32.mrb[0].mxu0
        %v1673 = vadd.f32 %v1129, %v1672
        %1674 = vmatprep.mubr.bf16.mxu0 0
        %1675 = vmatmul.mubr.bf16.gmra.mrb[0].mxu0 %v1039
        %v1676 = vpop.f32.mrb[0].mxu0
        %v1677 = vadd.f32 %v1125, %v1676
        %v1678 = vpop.f32.mrb[0].mxu0
        %v1679 = vadd.f32 %v1129, %v1678
        %v1680 = vpop.f32.mrb[0].mxu0
        %v1681 = vadd.f32 %v1125, %v1680
        %v1682 = vpop.f32.mrb[0].mxu0
        %v1683 = vadd.f32 %v1129, %v1682
        %1684 = vdwg.mxu0
        %1685 = vmatprep.subr.bf16.mxu0 %v1345
        %1686 = vmatpush1.bf16.msra.mxu0 %v1344
        %1687 = vmatprep.subr.bf16.mxu0 %v1353
        %1688 = vmatpush1.bf16.msra.mxu0 %v1352
        %1689 = vmatprep.subr.bf16.mxu0 %v1361
        %1690 = vmatpush1.bf16.msra.mxu0 %v1360
        %1691 = vmatprep.subr.bf16.mxu0 %v1369
        %1692 = vmatpush1.bf16.msra.mxu0 %v1368
        %1693 = vmatprep.subr.bf16.mxu0 %v1377
        %1694 = vmatpush1.bf16.msra.mxu0 %v1376
        %1695 = vmatprep.subr.bf16.mxu0 %v1385
        %1696 = vmatpush1.bf16.msra.mxu0 %v1384
        %1697 = vmatprep.subr.bf16.mxu0 %v1393
        %1698 = vmatpush1.bf16.msra.mxu0 %v1392
        %1699 = vmatprep.subr.bf16.mxu0 %v1401
        %1700 = vmatpush1.bf16.msra.mxu0 %v1400
        %1701 = vmatprep.subr.bf16.mxu0 0
        %1702 = vmatpush1.bf16.msra.mxu0 0
        %1703 = vmatprep.subr.bf16.mxu0 0
        %1704 = vmatpush1.bf16.msra.mxu0 0
        %1705 = vmatprep.subr.bf16.mxu0 0
        %1706 = vmatpush1.bf16.msra.mxu0 0
        %1707 = vmatprep.subr.bf16.mxu0 0
        %1708 = vmatpush1.bf16.msra.mxu0 0
        %1709 = vmatprep.subr.bf16.mxu0 0
        %1710 = vmatpush1.bf16.msra.mxu0 0
        %1711 = vmatprep.subr.bf16.mxu0 0
        %1712 = vmatpush1.bf16.msra.mxu0 0
        %1713 = vmatprep.subr.bf16.mxu0 0
        %1714 = vmatpush1.bf16.msra.mxu0 0
        %1715 = vmatprep.subr.bf16.mxu0 0
        %1716 = vmatpush1.bf16.msra.mxu0 0
        %1717 = vmatprep.mubr.bf16.mxu0 0
        %1718 = vmatmul.mubr.bf16.gmra.mrb[0].mxu0 %v1036
        %v1719 = vpop.f32.mrb[0].mxu0
        %v1720 = vadd.f32 %v1133, %v1719
        %v1721 = vpop.f32.mrb[0].mxu0
        %v1722 = vadd.f32 %v1137, %v1721
        %v1723 = vpop.f32.mrb[0].mxu0
        %v1724 = vadd.f32 %v1133, %v1723
        %v1725 = vpop.f32.mrb[0].mxu0
        %v1726 = vadd.f32 %v1137, %v1725
        %1727 = vmatprep.mubr.bf16.mxu0 0
        %1728 = vmatmul.mubr.bf16.gmra.mrb[0].mxu0 %v1037
        %v1729 = vpop.f32.mrb[0].mxu0
        %v1730 = vadd.f32 %v1133, %v1729
        %v1731 = vpop.f32.mrb[0].mxu0
        %v1732 = vadd.f32 %v1137, %v1731
        %v1733 = vpop.f32.mrb[0].mxu0
        %v1734 = vadd.f32 %v1133, %v1733
        %v1735 = vpop.f32.mrb[0].mxu0
        %v1736 = vadd.f32 %v1137, %v1735
        %1737 = vmatprep.mubr.bf16.mxu0 0
        %1738 = vmatmul.mubr.bf16.gmra.mrb[0].mxu0 %v1038
        %v1739 = vpop.f32.mrb[0].mxu0
        %v1740 = vadd.f32 %v1133, %v1739
        %v1741 = vpop.f32.mrb[0].mxu0
        %v1742 = vadd.f32 %v1137, %v1741
        %v1743 = vpop.f32.mrb[0].mxu0
        %v1744 = vadd.f32 %v1133, %v1743
        %v1745 = vpop.f32.mrb[0].mxu0
        %v1746 = vadd.f32 %v1137, %v1745
        %1747 = vmatprep.mubr.bf16.mxu0 0
        %1748 = vmatmul.mubr.bf16.gmra.mrb[0].mxu0 %v1039
        %v1749 = vpop.f32.mrb[0].mxu0
        %v1750 = vadd.f32 %v1133, %v1749
        %v1751 = vpop.f32.mrb[0].mxu0
        %v1752 = vadd.f32 %v1137, %v1751
        %v1753 = vpop.f32.mrb[0].mxu0
        %v1754 = vadd.f32 %v1133, %v1753
        %v1755 = vpop.f32.mrb[0].mxu0
        %v1756 = vadd.f32 %v1137, %v1755
        %1757 = vdwg.mxu0
        %v1758 = vmax.f32 %v1501, 0.0
        %v1759 = vmax.f32 %v1503, 0.0
        %v1760 = vmax.f32 %v1574, 0.0
        %v1761 = vmax.f32 %v1576, 0.0
        %v1762 = vmax.f32 %v1647, 0.0
        %v1763 = vmax.f32 %v1649, 0.0
        %v1764 = vmax.f32 %v1720, 0.0
        %v1765 = vmax.f32 %v1722, 0.0
        %v1766 = vmax.f32 %v1505, 0.0
        %v1767 = vmax.f32 %v1507, 0.0
        %v1768 = vmax.f32 %v1578, 0.0
        %v1769 = vmax.f32 %v1580, 0.0
        %v1770 = vmax.f32 %v1651, 0.0
        %v1771 = vmax.f32 %v1653, 0.0
        %v1772 = vmax.f32 %v1724, 0.0
        %v1773 = vmax.f32 %v1726, 0.0
        %v1774 = vmax.f32 %v1511, 0.0
        %v1775 = vmax.f32 %v1513, 0.0
        %v1776 = vmax.f32 %v1584, 0.0
        %v1777 = vmax.f32 %v1586, 0.0
        %v1778 = vmax.f32 %v1657, 0.0
        %v1779 = vmax.f32 %v1659, 0.0
        %v1780 = vmax.f32 %v1730, 0.0
        %v1781 = vmax.f32 %v1732, 0.0
        %v1782 = vmax.f32 %v1515, 0.0
        %v1783 = vmax.f32 %v1517, 0.0
        %v1784 = vmax.f32 %v1588, 0.0
        %v1785 = vmax.f32 %v1590, 0.0
        %v1786 = vmax.f32 %v1661, 0.0
        %v1787 = vmax.f32 %v1663, 0.0
        %v1788 = vmax.f32 %v1734, 0.0
        %v1789 = vmax.f32 %v1736, 0.0
        %v1790 = vmax.f32 %v1521, 0.0
        %v1791 = vmax.f32 %v1523, 0.0
        %v1792 = vmax.f32 %v1594, 0.0
        %v1793 = vmax.f32 %v1596, 0.0
        %v1794 = vmax.f32 %v1667, 0.0
        %v1795 = vmax.f32 %v1669, 0.0
        %v1796 = vmax.f32 %v1740, 0.0
        %v1797 = vmax.f32 %v1742, 0.0
        %v1798 = vmax.f32 %v1525, 0.0
        %v1799 = vmax.f32 %v1527, 0.0
        %v1800 = vmax.f32 %v1598, 0.0
        %v1801 = vmax.f32 %v1600, 0.0
        %v1802 = vmax.f32 %v1671, 0.0
        %v1803 = vmax.f32 %v1673, 0.0
        %v1804 = vmax.f32 %v1744, 0.0
        %v1805 = vmax.f32 %v1746, 0.0
        %v1806 = vmax.f32 %v1531, 0.0
        %v1807 = vmax.f32 %v1533, 0.0
        %v1808 = vmax.f32 %v1604, 0.0
        %v1809 = vmax.f32 %v1606, 0.0
        %v1810 = vmax.f32 %v1677, 0.0
        %v1811 = vmax.f32 %v1679, 0.0
        %v1812 = vmax.f32 %v1750, 0.0
        %v1813 = vmax.f32 %v1752, 0.0
        %v1814 = vmax.f32 %v1535, 0.0
        %v1815 = vmax.f32 %v1537, 0.0
        %v1816 = vmax.f32 %v1608, 0.0
        %v1817 = vmax.f32 %v1610, 0.0
        %v1818 = vmax.f32 %v1681, 0.0
        %v1819 = vmax.f32 %v1683, 0.0
        %v1820 = vmax.f32 %v1754, 0.0
        %v1821 = vmax.f32 %v1756, 0.0
        %v1822 = vpack.c.bf16 %v1766, %v1758
        %v1823 = vpack.c.bf16 %v1767, %v1759
        %v1824 = vpack.c.bf16 %v1768, %v1760
        %v1825 = vpack.c.bf16 %v1769, %v1761
        %v1826 = vpack.c.bf16 %v1770, %v1762
        %v1827 = vpack.c.bf16 %v1771, %v1763
        %v1828 = vpack.c.bf16 %v1772, %v1764
        %v1829 = vpack.c.bf16 %v1773, %v1765
        %v1830 = vpack.c.bf16 %v1782, %v1774
        %v1831 = vpack.c.bf16 %v1783, %v1775
        %v1832 = vpack.c.bf16 %v1784, %v1776
        %v1833 = vpack.c.bf16 %v1785, %v1777
        %v1834 = vpack.c.bf16 %v1786, %v1778
        %v1835 = vpack.c.bf16 %v1787, %v1779
        %v1836 = vpack.c.bf16 %v1788, %v1780
        %v1837 = vpack.c.bf16 %v1789, %v1781
        %v1838 = vpack.c.bf16 %v1798, %v1790
        %v1839 = vpack.c.bf16 %v1799, %v1791
        %v1840 = vpack.c.bf16 %v1800, %v1792
        %v1841 = vpack.c.bf16 %v1801, %v1793
        %v1842 = vpack.c.bf16 %v1802, %v1794
        %v1843 = vpack.c.bf16 %v1803, %v1795
        %v1844 = vpack.c.bf16 %v1804, %v1796
        %v1845 = vpack.c.bf16 %v1805, %v1797
        %v1846 = vpack.c.bf16 %v1814, %v1806
        %v1847 = vpack.c.bf16 %v1815, %v1807
        %v1848 = vpack.c.bf16 %v1816, %v1808
        %v1849 = vpack.c.bf16 %v1817, %v1809
        %v1850 = vpack.c.bf16 %v1818, %v1810
        %v1851 = vpack.c.bf16 %v1819, %v1811
        %v1852 = vpack.c.bf16 %v1820, %v1812
        %v1853 = vpack.c.bf16 %v1821, %v1813
        %v1886 = vunpack.c.l.b16 %v1822
        %v1887 = vunpack.c.l.b16 %v1823
        %v1888 = vunpack.c.l.b16 %v1824
        %v1889 = vunpack.c.l.b16 %v1825
        %v1890 = vunpack.c.l.b16 %v1826
        %v1891 = vunpack.c.l.b16 %v1827
        %v1892 = vunpack.c.l.b16 %v1828
        %v1893 = vunpack.c.l.b16 %v1829
        %v1894 = vunpack.c.h.b16 %v1822
        %v1895 = vunpack.c.h.b16 %v1823
        %v1896 = vunpack.c.h.b16 %v1824
        %v1897 = vunpack.c.h.b16 %v1825
        %v1898 = vunpack.c.h.b16 %v1826
        %v1899 = vunpack.c.h.b16 %v1827
        %v1900 = vunpack.c.h.b16 %v1828
        %v1901 = vunpack.c.h.b16 %v1829
        %v1902 = vunpack.c.l.b16 %v1830
        %v1903 = vunpack.c.l.b16 %v1831
        %v1904 = vunpack.c.l.b16 %v1832
        %v1905 = vunpack.c.l.b16 %v1833
        %v1906 = vunpack.c.l.b16 %v1834
        %v1907 = vunpack.c.l.b16 %v1835
        %v1908 = vunpack.c.l.b16 %v1836
        %v1909 = vunpack.c.l.b16 %v1837
        %v1910 = vunpack.c.h.b16 %v1830
        %v1911 = vunpack.c.h.b16 %v1831
        %v1912 = vunpack.c.h.b16 %v1832
        %v1913 = vunpack.c.h.b16 %v1833
        %v1914 = vunpack.c.h.b16 %v1834
        %v1915 = vunpack.c.h.b16 %v1835
        %v1916 = vunpack.c.h.b16 %v1836
        %v1917 = vunpack.c.h.b16 %v1837
        %v1918 = vunpack.c.l.b16 %v1838
        %v1919 = vunpack.c.l.b16 %v1839
        %v1920 = vunpack.c.l.b16 %v1840
        %v1921 = vunpack.c.l.b16 %v1841
        %v1922 = vunpack.c.l.b16 %v1842
        %v1923 = vunpack.c.l.b16 %v1843
        %v1924 = vunpack.c.l.b16 %v1844
        %v1925 = vunpack.c.l.b16 %v1845
        %v1926 = vunpack.c.h.b16 %v1838
        %v1927 = vunpack.c.h.b16 %v1839
        %v1928 = vunpack.c.h.b16 %v1840
        %v1929 = vunpack.c.h.b16 %v1841
        %v1930 = vunpack.c.h.b16 %v1842
        %v1931 = vunpack.c.h.b16 %v1843
        %v1932 = vunpack.c.h.b16 %v1844
        %v1933 = vunpack.c.h.b16 %v1845
        %v1934 = vunpack.c.l.b16 %v1846
        %v1935 = vunpack.c.l.b16 %v1847
        %v1936 = vunpack.c.l.b16 %v1848
        %v1937 = vunpack.c.l.b16 %v1849
        %v1938 = vunpack.c.l.b16 %v1850
        %v1939 = vunpack.c.l.b16 %v1851
        %v1940 = vunpack.c.l.b16 %v1852
        %v1941 = vunpack.c.l.b16 %v1853
        %v1942 = vunpack.c.h.b16 %v1846
        %v1943 = vunpack.c.h.b16 %v1847
        %v1944 = vunpack.c.h.b16 %v1848
        %v1945 = vunpack.c.h.b16 %v1849
        %v1946 = vunpack.c.h.b16 %v1850
        %v1947 = vunpack.c.h.b16 %v1851
        %v1948 = vunpack.c.h.b16 %v1852
        %v1949 = vunpack.c.h.b16 %v1853
        %v1950 = vpack.c.b16 %v1887, %v1886
        %v1951 = vpack.c.b16 %v1889, %v1888
        %v1952 = vpack.c.b16 %v1891, %v1890
        %v1953 = vpack.c.b16 %v1893, %v1892
        %v1954 = vpack.c.b16 %v1895, %v1894
        %v1955 = vpack.c.b16 %v1897, %v1896
        %v1956 = vpack.c.b16 %v1899, %v1898
        %v1957 = vpack.c.b16 %v1901, %v1900
        %v1958 = vpack.c.b16 %v1903, %v1902
        %v1959 = vpack.c.b16 %v1905, %v1904
        %v1960 = vpack.c.b16 %v1907, %v1906
        %v1961 = vpack.c.b16 %v1909, %v1908
        %v1962 = vpack.c.b16 %v1911, %v1910
        %v1963 = vpack.c.b16 %v1913, %v1912
        %v1964 = vpack.c.b16 %v1915, %v1914
        %v1965 = vpack.c.b16 %v1917, %v1916
        %v1966 = vpack.c.b16 %v1919, %v1918
        %v1967 = vpack.c.b16 %v1921, %v1920
        %v1968 = vpack.c.b16 %v1923, %v1922
        %v1969 = vpack.c.b16 %v1925, %v1924
        %v1970 = vpack.c.b16 %v1927, %v1926
        %v1971 = vpack.c.b16 %v1929, %v1928
        %v1972 = vpack.c.b16 %v1931, %v1930
        %v1973 = vpack.c.b16 %v1933, %v1932
        %v1974 = vpack.c.b16 %v1935, %v1934
        %v1975 = vpack.c.b16 %v1937, %v1936
        %v1976 = vpack.c.b16 %v1939, %v1938
        %v1977 = vpack.c.b16 %v1941, %v1940
        %v1978 = vpack.c.b16 %v1943, %v1942
        %v1979 = vpack.c.b16 %v1945, %v1944
        %v1980 = vpack.c.b16 %v1947, %v1946
        %v1981 = vpack.c.b16 %v1949, %v1948
        %2014 = vst [vmem:[%s493] sm:$0xff] %v1950
        %2015 = vst [vmem:[%s493 + $0x8] sm:$0xff] %v1951
        %2016 = vst [vmem:[%s493 + $0x10] sm:$0xff] %v1952
        %2017 = vst [vmem:[%s493 + $0x18] sm:$0xff] %v1953
        %2018 = vst [vmem:[%s493 + $0x20] sm:$0xff] %v1954
        %2019 = vst [vmem:[%s493 + $0x28] sm:$0xff] %v1955
        %2020 = vst [vmem:[%s493 + $0x30] sm:$0xff] %v1956
        %2021 = vst [vmem:[%s493 + $0x38] sm:$0xff] %v1957
        %2022 = vst [vmem:[%s493 + $0x40] sm:$0xff] %v1958
        %2023 = vst [vmem:[%s493 + $0x48] sm:$0xff] %v1959
        %2024 = vst [vmem:[%s493 + $0x50] sm:$0xff] %v1960
        %2025 = vst [vmem:[%s493 + $0x58] sm:$0xff] %v1961
        %2026 = vst [vmem:[%s493 + $0x60] sm:$0xff] %v1962
        %2027 = vst [vmem:[%s493 + $0x68] sm:$0xff] %v1963
        %2028 = vst [vmem:[%s493 + $0x70] sm:$0xff] %v1964
        %2029 = vst [vmem:[%s493 + $0x78] sm:$0xff] %v1965
        %2030 = vst [vmem:[%s493 + $0x80] sm:$0xff] %v1966
        %2031 = vst [vmem:[%s493 + $0x88] sm:$0xff] %v1967
        %2032 = vst [vmem:[%s493 + $0x90] sm:$0xff] %v1968
        %2033 = vst [vmem:[%s493 + $0x98] sm:$0xff] %v1969
        %2034 = vst [vmem:[%s493 + $0xa0] sm:$0xff] %v1970
        %2035 = vst [vmem:[%s493 + $0xa8] sm:$0xff] %v1971
        %2036 = vst [vmem:[%s493 + $0xb0] sm:$0xff] %v1972
        %2037 = vst [vmem:[%s493 + $0xb8] sm:$0xff] %v1973
        %2038 = vst [vmem:[%s493 + $0xc0] sm:$0xff] %v1974
        %2039 = vst [vmem:[%s493 + $0xc8] sm:$0xff] %v1975
        %2040 = vst [vmem:[%s493 + $0xd0] sm:$0xff] %v1976
        %2041 = vst [vmem:[%s493 + $0xd8] sm:$0xff] %v1977
        %2042 = vst [vmem:[%s493 + $0xe0] sm:$0xff] %v1978
        %2043 = vst [vmem:[%s493 + $0xe8] sm:$0xff] %v1979
        %2044 = vst [vmem:[%s493 + $0xf0] sm:$0xff] %v1980
        %2045 = vst [vmem:[%s493 + $0xf8] sm:$0xff] %v1981
        %v2046 = vmax.f32 %v1758, %v1766
        %v2047 = vmax.f32 %v2046, %v1774
        %v2048 = vmax.f32 %v2047, %v1782
        %v2049 = vmax.f32 %v2048, %v1790
        %v2050 = vmax.f32 %v2049, %v1798
        %v2051 = vmax.f32 %v2050, %v1806
        %v2052 = vmax.f32 %v2051, %v1814
        %v2053 = vrot.slane %v2052, 4
        %v2054 = vmax.f32 %v2052, %v2053
        %v2055 = vrot.slane %v2054, 2
        %v2056 = vmax.f32 %v2054, %v2055
        %v2057 = vrot.slane %v2056, 1
        %v2058 = vmax.f32 %v2056, %v2057
        %v2059 = vmax.f32 %v1759, %v1767
        %v2060 = vmax.f32 %v2059, %v1775
        %v2061 = vmax.f32 %v2060, %v1783
        %v2062 = vmax.f32 %v2061, %v1791
        %v2063 = vmax.f32 %v2062, %v1799
        %v2064 = vmax.f32 %v2063, %v1807
        %v2065 = vmax.f32 %v2064, %v1815
        %v2066 = vrot.slane %v2065, 4
        %v2067 = vmax.f32 %v2065, %v2066
        %v2068 = vrot.slane %v2067, 2
        %v2069 = vmax.f32 %v2067, %v2068
        %v2070 = vrot.slane %v2069, 1
        %v2071 = vmax.f32 %v2069, %v2070
        %v2072 = vmax.f32 %v1760, %v1768
        %v2073 = vmax.f32 %v2072, %v1776
        %v2074 = vmax.f32 %v2073, %v1784
        %v2075 = vmax.f32 %v2074, %v1792
        %v2076 = vmax.f32 %v2075, %v1800
        %v2077 = vmax.f32 %v2076, %v1808
        %v2078 = vmax.f32 %v2077, %v1816
        %v2079 = vrot.slane %v2078, 4
        %v2080 = vmax.f32 %v2078, %v2079
        %v2081 = vrot.slane %v2080, 2
        %v2082 = vmax.f32 %v2080, %v2081
        %v2083 = vrot.slane %v2082, 1
        %v2084 = vmax.f32 %v2082, %v2083
        %v2085 = vmax.f32 %v1761, %v1769
        %v2086 = vmax.f32 %v2085, %v1777
        %v2087 = vmax.f32 %v2086, %v1785
        %v2088 = vmax.f32 %v2087, %v1793
        %v2089 = vmax.f32 %v2088, %v1801
        %v2090 = vmax.f32 %v2089, %v1809
        %v2091 = vmax.f32 %v2090, %v1817
        %v2092 = vrot.slane %v2091, 4
        %v2093 = vmax.f32 %v2091, %v2092
        %v2094 = vrot.slane %v2093, 2
        %v2095 = vmax.f32 %v2093, %v2094
        %v2096 = vrot.slane %v2095, 1
        %v2097 = vmax.f32 %v2095, %v2096
        %v2098 = vmax.f32 %v1762, %v1770
        %v2099 = vmax.f32 %v2098, %v1778
        %v2100 = vmax.f32 %v2099, %v1786
        %v2101 = vmax.f32 %v2100, %v1794
        %v2102 = vmax.f32 %v2101, %v1802
        %v2103 = vmax.f32 %v2102, %v1810
        %v2104 = vmax.f32 %v2103, %v1818
        %v2105 = vrot.slane %v2104, 4
        %v2106 = vmax.f32 %v2104, %v2105
        %v2107 = vrot.slane %v2106, 2
        %v2108 = vmax.f32 %v2106, %v2107
        %v2109 = vrot.slane %v2108, 1
        %v2110 = vmax.f32 %v2108, %v2109
        %v2111 = vmax.f32 %v1763, %v1771
        %v2112 = vmax.f32 %v2111, %v1779
        %v2113 = vmax.f32 %v2112, %v1787
        %v2114 = vmax.f32 %v2113, %v1795
        %v2115 = vmax.f32 %v2114, %v1803
        %v2116 = vmax.f32 %v2115, %v1811
        %v2117 = vmax.f32 %v2116, %v1819
        %v2118 = vrot.slane %v2117, 4
        %v2119 = vmax.f32 %v2117, %v2118
        %v2120 = vrot.slane %v2119, 2
        %v2121 = vmax.f32 %v2119, %v2120
        %v2122 = vrot.slane %v2121, 1
        %v2123 = vmax.f32 %v2121, %v2122
        %v2124 = vmax.f32 %v1764, %v1772
        %v2125 = vmax.f32 %v2124, %v1780
        %v2126 = vmax.f32 %v2125, %v1788
        %v2127 = vmax.f32 %v2126, %v1796
        %v2128 = vmax.f32 %v2127, %v1804
        %v2129 = vmax.f32 %v2128, %v1812
        %v2130 = vmax.f32 %v2129, %v1820
        %v2131 = vrot.slane %v2130, 4
        %v2132 = vmax.f32 %v2130, %v2131
        %v2133 = vrot.slane %v2132, 2
        %v2134 = vmax.f32 %v2132, %v2133
        %v2135 = vrot.slane %v2134, 1
        %v2136 = vmax.f32 %v2134, %v2135
        %v2137 = vmax.f32 %v1765, %v1773
        %v2138 = vmax.f32 %v2137, %v1781
        %v2139 = vmax.f32 %v2138, %v1789
        %v2140 = vmax.f32 %v2139, %v1797
        %v2141 = vmax.f32 %v2140, %v1805
        %v2142 = vmax.f32 %v2141, %v1813
        %v2143 = vmax.f32 %v2142, %v1821
        %v2144 = vrot.slane %v2143, 4
        %v2145 = vmax.f32 %v2143, %v2144
        %v2146 = vrot.slane %v2145, 2
        %v2147 = vmax.f32 %v2145, %v2146
        %v2148 = vrot.slane %v2147, 1
        %v2149 = vmax.f32 %v2147, %v2148
        %p2150 = scmp.eq.s32.totalorder %s39, 0
        // Predicated region
        $region77: #{tpu_custom_call.1} parent=63 // pred_check
          %p2151 = pneg %p2150
        $region78: #{tpu_custom_call.1} parent=63 // pred_check_branch
          %2153 = sbr.rel (%p2151) target = $region80
        $region79: #{tpu_custom_call.1} parent=63 // pred_region
          %v2162 = vcombine.low %v2058, %v2071
          %v2163 = vcombine.low %v2084, %v2097
          %v2164 = vcombine.low %v2110, %v2123
          %v2165 = vcombine.low %v2136, %v2149
          %v2167 = vunpack.c.l.s4 1966171168
          %v2168 = vunpack.c.0.s8 %v2167
          %v2169 = vlaneseq
          %v2170 = vshrl.u32 %v2169, 7
          %v2171 = vsub.s32 %v2168, %v2170
          %v2172 = vrot.slane %v2162, %v2171
          %v2174 = vunpack.c.l.s4 1966171168
          %v2175 = vunpack.c.0.s8 %v2174
          %v2176 = vlaneseq
          %v2177 = vshrl.u32 %v2176, 7
          %v2178 = vsub.s32 %v2175, %v2177
          %v2179 = vrot.slane %v2163, %v2178
          %v2181 = vunpack.c.l.s4 1966171168
          %v2182 = vunpack.c.0.s8 %v2181
          %v2183 = vlaneseq
          %v2184 = vshrl.u32 %v2183, 7
          %v2185 = vsub.s32 %v2182, %v2184
          %v2186 = vrot.slane %v2164, %v2185
          %v2188 = vunpack.c.l.s4 1966171168
          %v2189 = vunpack.c.0.s8 %v2188
          %v2190 = vlaneseq
          %v2191 = vshrl.u32 %v2190, 7
          %v2192 = vsub.s32 %v2189, %v2191
          %v2193 = vrot.slane %v2165, %v2192
          %v2194 = vcombine.low %v2172, %v2179
          %v2195 = vcombine.low %v2186, %v2193
          %v2197 = vunpack.c.l.s4 1966171168
          %v2198 = vunpack.c.0.s8 %v2197
          %v2199 = vlaneseq
          %v2200 = vshrl.u32 %v2199, 7
          %v2201 = vsub.s32 %v2198, %v2200
          %v2202 = vrot.slane %v2194, %v2201
          %v2204 = vunpack.c.l.s4 1966171168
          %v2205 = vunpack.c.0.s8 %v2204
          %v2206 = vlaneseq
          %v2207 = vshrl.u32 %v2206, 7
          %v2208 = vsub.s32 %v2205, %v2207
          %v2209 = vrot.slane %v2195, %v2208
          %v2210 = vcombine.low %v2202, %v2209
          %2212 = vst [vmem:[%s500] sm:$0xff] %v2210
        $region80: #{tpu_custom_call.1} parent=63 // pred_fallthru
          _
        %p2213 = scmp.gt.s32.totalorder %s39, 0
        // Predicated region
        $region81: #{tpu_custom_call.1} parent=63 // pred_check
          %p2214 = pneg %p2213
        $region82: #{tpu_custom_call.1} parent=63 // pred_check_branch
          %2216 = sbr.rel (%p2214) target = $region84
        $region83: #{tpu_custom_call.1} parent=63 // pred_region
          %v2217 = vld [vmem:[%s500] sm:$0xff]
          %v2226 = vcombine.low %v2058, %v2071
          %v2227 = vcombine.low %v2084, %v2097
          %v2228 = vcombine.low %v2110, %v2123
          %v2229 = vcombine.low %v2136, %v2149
          %v2231 = vunpack.c.l.s4 1966171168
          %v2232 = vunpack.c.0.s8 %v2231
          %v2233 = vlaneseq
          %v2234 = vshrl.u32 %v2233, 7
          %v2235 = vsub.s32 %v2232, %v2234
          %v2236 = vrot.slane %v2226, %v2235
          %v2238 = vunpack.c.l.s4 1966171168
          %v2239 = vunpack.c.0.s8 %v2238
          %v2240 = vlaneseq
          %v2241 = vshrl.u32 %v2240, 7
          %v2242 = vsub.s32 %v2239, %v2241
          %v2243 = vrot.slane %v2227, %v2242
          %v2245 = vunpack.c.l.s4 1966171168
          %v2246 = vunpack.c.0.s8 %v2245
          %v2247 = vlaneseq
          %v2248 = vshrl.u32 %v2247, 7
          %v2249 = vsub.s32 %v2246, %v2248
          %v2250 = vrot.slane %v2228, %v2249
          %v2252 = vunpack.c.l.s4 1966171168
          %v2253 = vunpack.c.0.s8 %v2252
          %v2254 = vlaneseq
          %v2255 = vshrl.u32 %v2254, 7
          %v2256 = vsub.s32 %v2253, %v2255
          %v2257 = vrot.slane %v2229, %v2256
          %v2258 = vcombine.low %v2236, %v2243
          %v2259 = vcombine.low %v2250, %v2257
          %v2261 = vunpack.c.l.s4 1966171168
          %v2262 = vunpack.c.0.s8 %v2261
          %v2263 = vlaneseq
          %v2264 = vshrl.u32 %v2263, 7
          %v2265 = vsub.s32 %v2262, %v2264
          %v2266 = vrot.slane %v2258, %v2265
          %v2268 = vunpack.c.l.s4 1966171168
          %v2269 = vunpack.c.0.s8 %v2268
          %v2270 = vlaneseq
          %v2271 = vshrl.u32 %v2270, 7
          %v2272 = vsub.s32 %v2269, %v2271
          %v2273 = vrot.slane %v2259, %v2272
          %v2274 = vcombine.low %v2266, %v2273
          %v2276 = vmax.f32 %v2217, %v2274
          %2277 = vst [vmem:[%s500] sm:$0xff] %v2276
        $region84: #{tpu_custom_call.1} parent=63 // pred_fallthru
          _
        %s2278 = sand.u32 %s303, 1
        %s2279 = scalar_lea.sflag [#allocation4], %s2278
        %s2280 = sand.u32 %s303, 1
        %s2281 = smul.addr %s2280, 256
        %s2282 = scalar_lea.vmem [#allocation8], %s2281
        %s2283 = sand.u32 %s331, 1
        %s2284 = scalar_lea.sflag [#allocation10], %s2283
        %s2285 = sand.u32 %s331, 1
        %s2286 = smul.addr %s2285, 8
        %s2287 = scalar_lea.vmem [#allocation9], %s2286
        // Predicated region
        $region85: #{tpu_custom_call.1} parent=63 // pred_check
          %p2288 = pneg %p313
        $region86: #{tpu_custom_call.1} parent=63 // pred_check_branch
          %2290 = sbr.rel (%p2288) target = $region88
        $region87: #{tpu_custom_call.1} parent=63 // pred_region
          %s2291 = sadd.s32 %s38, %s39
          %s2292 = smul.u32 8, %s2291
          %s2294 = ssub.s32 4096, 4096
          %2295 = vsyncadd %s2279, %s2294
          %s2296 = smul.addr %s2292, 8
          %s2297 = smul.addr %s37, 64
          %s2298 = sadd.s32 %s2296, %s2297
          %s2299 = smul.addr %s2298, 64
          %s2300 = scalar_lea.hbm %s11, %s2299
          %s2301 = sshll.u32 %s2282, 4
          %s2302 = int_to_ptr.vmem [resolvable:$true] %s2301
          %2307 = dma.vmem_to_hbm [thread:$0]  %s2302, 4096, %s2300, %s2279, 512, 512, 32
        $region88: #{tpu_custom_call.1} parent=63 // pred_fallthru
          _
        // Predicated region
        $region89: #{tpu_custom_call.1} parent=63 // pred_check
          %p2308 = pneg %p341
        $region90: #{tpu_custom_call.1} parent=63 // pred_check_branch
          %2310 = sbr.rel (%p2308) target = $region92
        $region91: #{tpu_custom_call.1} parent=63 // pred_region
          %s2312 = ssub.s32 128, 128
          %2313 = vsyncadd %s2284, %s2312
          %s2314 = smul.addr %s38, 8
          %s2315 = smul.addr %s37, 8
          %s2316 = sadd.s32 %s2314, %s2315
          %s2317 = smul.addr %s2316, 16
          %s2318 = scalar_lea.hbm %s12, %s2317
          %s2320 = sshll.u32 %s2287, 4
          %s2321 = int_to_ptr.vmem [resolvable:$true] %s2320
          %2323 = dma.vmem_to_hbm [thread:$0]  %s2321, 128, %s2318, %s2284
        $region92: #{tpu_custom_call.1} parent=63 // pred_fallthru
          _
      $region64: #{tpu_custom_call.1} parent=5 // pred_fallthru
        _
      %p2324 = scmp.le.s32.totalorder 2, %s27
      // Predicated region
      $region93: #{tpu_custom_call.1} parent=5 // pred_check
        %p2325 = pneg %p2324
      $region94: #{tpu_custom_call.1} parent=5 // pred_check_branch
        %2327 = sbr.rel (%p2325) target = $region96
      $region95: #{tpu_custom_call.1} parent=5 // pred_region
        %s2328 = ssub.s32 %s27, 2
        // Predicated region
        $region97: #{tpu_custom_call.1} parent=95 // pred_check
          %p2329 = pneg %p319
        $region98: #{tpu_custom_call.1} parent=95 // pred_check_branch
          %2331 = sbr.rel (%p2329) target = $region100
        $region99: #{tpu_custom_call.1} parent=95 // pred_region
          %s2332 = sand.u32 %s304, 1
          %s2333 = scalar_lea.sflag [#allocation4], %s2332
          %s2334 = sand.u32 %s304, 1
          %s2335 = smul.addr %s2334, 256
          %s2336 = scalar_lea.vmem [#allocation8], %s2335
          %2337 = dma.done %s2333, 4096
        $region100: #{tpu_custom_call.1} parent=95 // pred_fallthru
          _
        // Predicated region
        $region101: #{tpu_custom_call.1} parent=95 // pred_check
          %p2338 = pneg %p347
        $region102: #{tpu_custom_call.1} parent=95 // pred_check_branch
          %2340 = sbr.rel (%p2338) target = $region104
        $region103: #{tpu_custom_call.1} parent=95 // pred_region
          %s2341 = sand.u32 %s332, 1
          %s2342 = scalar_lea.sflag [#allocation10], %s2341
          %s2343 = sand.u32 %s332, 1
          %s2344 = smul.addr %s2343, 8
          %s2345 = scalar_lea.vmem [#allocation9], %s2344
          %2346 = dma.done %s2342, 128
        $region104: #{tpu_custom_call.1} parent=95 // pred_fallthru
          _
      $region96: #{tpu_custom_call.1} parent=5 // pred_fallthru
        _
    $region6: #{tpu_custom_call.1} parent=1 // loop_footer
      %s31 = sadd.s32 1, %s27
    $region7: #{tpu_custom_call.1} parent=1 // loop_footer_branch
      %26 = sbr.rel target = $region3
    $region8: #{tpu_custom_call.1} parent=1 // loop_exit
      _
    %2347 = vsyncpa [#allocation3], 1
    %s2348 = scalar_lea.sflag [#allocation3], 1
    %2349 = vsyncpa %s2348, 1
    %2350 = vsyncpa [#allocation6], 1
    %2351 = vsyncpa [#allocation4], 1
    %s2352 = scalar_lea.sflag [#allocation4], 1
    %2353 = vsyncpa %s2352, 1
    %2354 = vsyncpa [#allocation10], 1
    %s2355 = scalar_lea.sflag [#allocation10], 1
    %2356 = vsyncpa %s2355, 1

</llo_original>
